<compile_context>
chip_gen: v5e
topology: v5e:2x2
jax: 0.10.0
libtpu: 0.0.40
codegen_flags: <defaults>
</compile_context>

<pallas_src>
import functools
import math

import jax
import jax.numpy as jnp
from jax import lax
from jax.experimental import pallas as pl
from jax.experimental.pallas import tpu as pltpu

# ----------------- small synthetic T5 v1.1 config (lane-dense) -----------------
VOCAB = 128          # stand-in for the 32128-token T5 vocab
D_MODEL = 128        # stand-in for 1024 (t5-v1_1-large); multiple of 128 lanes
N_HEADS = 4
D_KV = 32            # per-head dim; inner dim = N_HEADS * D_KV = 128 (lane-dense)
INNER = N_HEADS * D_KV
D_FF = 256           # gated-GELU FF inner dim (multiple of 128)
N_LAYERS = 2
MAX_LEN = 8          # stand-in for max_length=77
BATCH = 2
REL_BUCKETS = 32
REL_MAX_DIST = 128
EPS = 1e-6


# ------------------------------ kernel helpers ---------------------------------
def _rmsnorm(x, w):
    # T5LayerNorm: no mean subtraction, no bias; f32 math.
    var = jnp.mean(x * x, axis=-1, keepdims=True)
    return x * lax.rsqrt(var + EPS) * w


def _t5_encoder_kernel(h0_ref, bias_ref, ln1_ref, wqkv_ref, wo_ref,
                       ln2_ref, win_ref, wout_ref, lnf_ref,
                       out_ref, h_scr,
                       *, n_batch, seq_len, n_heads, d_kv, d_ff):
    """One grid step == one full transformer layer; h stays resident in VMEM."""
    inner = n_heads * d_kv
    layer = pl.program_id(0)

    @pl.when(layer == 0)
    def _():
        h_scr[...] = h0_ref[...]          # load embeddings into the resident stream

    # ---------------- self-attention sublayer ----------------
    h = h_scr[...]                                             # (B*S, D) f32
    xb = _rmsnorm(h, ln1_ref[0]).astype(jnp.bfloat16)          # bf16 at the MXU boundary

    # Fused Q/K/V projection: one wide matmul, then 128-lane-aligned slices.
    qkv = jnp.dot(xb, wqkv_ref[0], preferred_element_type=jnp.float32)  # (B*S, 3*INNER)
    q = qkv[:, :inner]
    k = qkv[:, inner:2 * inner]
    v = qkv[:, 2 * inner:]

    # Per-batch / per-head attention; head outputs are kept in registers and
    # concatenated once lane-dense (no masked scratch stores).
    ctx_rows = []
    for b in range(n_batch):
        r0, r1 = b * seq_len, (b + 1) * seq_len
        qb, kb, vb = q[r0:r1], k[r0:r1], v[r0:r1]              # (S, INNER) row blocks
        head_ctx = []
        for hh in range(n_heads):
            c0, c1 = hh * d_kv, (hh + 1) * d_kv
            qh = qb[:, c0:c1].astype(jnp.bfloat16)
            kh = kb[:, c0:c1].astype(jnp.bfloat16)
            vh = vb[:, c0:c1].astype(jnp.bfloat16)
            # T5: NO 1/sqrt(d_k) scaling; additive relative-position bias.
            s = lax.dot_general(qh, kh, (((1,), (1,)), ((), ())),
                                preferred_element_type=jnp.float32)     # (S, S) = q @ k.T
            s = s + bias_ref[hh]
            m = jnp.max(s, axis=-1, keepdims=True)
            p = jnp.exp(s - m)                                          # f32 softmax
            p = p * pl.reciprocal(jnp.sum(p, axis=-1, keepdims=True), approx=True)
            head_ctx.append(jnp.dot(p.astype(jnp.bfloat16), vh,
                                    preferred_element_type=jnp.float32))  # (S, D_KV)
        ctx_rows.append(jnp.concatenate(head_ctx, axis=-1))              # (S, INNER)
    ctx = jnp.concatenate(ctx_rows, axis=0).astype(jnp.bfloat16)         # (B*S, INNER)

    # Output projection with fused residual add.
    h = h + jnp.dot(ctx, wo_ref[0], preferred_element_type=jnp.float32)

    # ---------------- feed-forward sublayer -------------------
    xb = _rmsnorm(h, ln2_ref[0]).astype(jnp.bfloat16)
    # Fused wi_0 / wi_1: one wide matmul, lane-aligned slices.
    gu = jnp.dot(xb, win_ref[0], preferred_element_type=jnp.float32)     # (B*S, 2*D_FF)
    g = gu[:, :d_ff]
    u = gu[:, d_ff:]
    # T5DenseGatedActDense "gelu_new" (tanh approximation), f32 math.
    c = math.sqrt(2.0 / math.pi)
    gelu = 0.5 * g * (1.0 + jnp.tanh(c * (g + 0.044715 * g * g * g)))
    ff = (gelu * u).astype(jnp.bfloat16)
    h = h + jnp.dot(ff, wout_ref[0], preferred_element_type=jnp.float32)

    h_scr[...] = h                                             # carry residual stream

    # Final RMSNorm folded into the last layer's grid step.
    @pl.when(layer == pl.num_programs(0) - 1)
    def _():
        out_ref[...] = _rmsnorm(h, lnf_ref[...])


# ------------------------------ Pallas wrapper ----------------------------------
def t5_encoder_stack(h0, pos_bias, ln1, wqkv, wo, ln2, win, wout, lnf):
    """Whole encoder stack in a single pallas_call; returns (B*S, D) f32."""
    BS, D = h0.shape
    L = wqkv.shape[0]
    H, S, _ = pos_bias.shape
    n_batch = BS // S
    inner = wo.shape[1]
    d_kv = inner // H
    d_ff = wout.shape[1]

    kernel = functools.partial(_t5_encoder_kernel, n_batch=n_batch, seq_len=S,
                               n_heads=H, d_kv=d_kv, d_ff=d_ff)

    return pl.pallas_call(
        kernel,
        out_shape=jax.ShapeDtypeStruct((BS, D), jnp.float32),
        grid_spec=pltpu.PrefetchScalarGridSpec(
            num_scalar_prefetch=0,
            grid=(L,),
            in_specs=[
                pl.BlockSpec((BS, D), lambda l: (0, 0)),               # embeddings (read @ l==0)
                pl.BlockSpec((H, S, S), lambda l: (0, 0, 0)),          # shared position bias
                pl.BlockSpec((1, 1, D), lambda l: (l, 0, 0)),          # ln1[l]
                pl.BlockSpec((1, D, 3 * inner), lambda l: (l, 0, 0)),  # fused Wqkv[l]
                pl.BlockSpec((1, inner, D), lambda l: (l, 0, 0)),      # Wo[l]
                pl.BlockSpec((1, 1, D), lambda l: (l, 0, 0)),          # ln2[l]
                pl.BlockSpec((1, D, 2 * d_ff), lambda l: (l, 0, 0)),   # fused Wi0|Wi1[l]
                pl.BlockSpec((1, d_ff, D), lambda l: (l, 0, 0)),       # Wo_ff[l]
                pl.BlockSpec((1, D), lambda l: (0, 0)),                # final layernorm weight
            ],
            # Constant block index over the layer axis: output stays resident,
            # written back to HBM once at the end of the grid.
            out_specs=pl.BlockSpec((BS, D), lambda l: (0, 0)),
            scratch_shapes=[pltpu.VMEM((BS, D), jnp.float32)],         # resident residual h
        ),
        compiler_params=pltpu.CompilerParams(
            dimension_semantics=("arbitrary",),        # layer axis carries state
            vmem_limit_bytes=48 * 1024 * 1024,         # explicit; trivial at toy sizes
        ),
    )(h0, pos_bias, ln1, wqkv, wo, ln2, win, wout, lnf)


# --------------------------------- JAX glue -------------------------------------
def _relative_position_bucket(rel_pos, num_buckets=REL_BUCKETS, max_distance=REL_MAX_DIST):
    # Bidirectional bucketing, exactly as in HF T5Attention._relative_position_bucket.
    num_buckets //= 2
    buckets = (rel_pos > 0).astype(jnp.int32) * num_buckets
    n = jnp.abs(rel_pos)
    max_exact = num_buckets // 2
    is_small = n < max_exact
    n_safe = jnp.maximum(n, 1).astype(jnp.float32)
    val_if_large = max_exact + (
        jnp.log(n_safe / max_exact)
        / math.log(max_distance / max_exact)
        * (num_buckets - max_exact)
    ).astype(jnp.int32)
    val_if_large = jnp.minimum(val_if_large, num_buckets - 1)
    return buckets + jnp.where(is_small, n, val_if_large)


def compute_position_bias(rel_emb, seq_len):
    ctx = jnp.arange(seq_len)[:, None]
    mem = jnp.arange(seq_len)[None, :]
    buckets = _relative_position_bucket(mem - ctx)               # (S, S)
    bias = rel_emb[buckets]                                      # (S, S, H)
    return jnp.transpose(bias, (2, 0, 1)).astype(jnp.float32)    # (H, S, S)


def init_params(key):
    # Deterministic synthetic weights (frozen T5 encoder; no checkpoint loading).
    # A real checkpoint would transpose HF's (out, in) Linear weights, fuse
    # q|k|v and wi_0|wi_1 column-wise, and stack layers along the leading axis.
    keys = jax.random.split(key, 6)

    def w(k, shape):  # weights stored in bf16 (MXU inputs)
        return (jax.random.normal(k, shape, jnp.float32) * 0.02).astype(jnp.bfloat16)

    return {
        "embed": jax.random.normal(keys[0], (VOCAB, D_MODEL), jnp.float32) * 0.02,
        "rel_bias": jax.random.normal(keys[1], (REL_BUCKETS, N_HEADS), jnp.float32) * 0.02,
        "ln1": jnp.ones((N_LAYERS, 1, D_MODEL), jnp.float32),
        "wqkv": w(keys[2], (N_LAYERS, D_MODEL, 3 * INNER)),
        "wo": w(keys[3], (N_LAYERS, INNER, D_MODEL)),
        "ln2": jnp.ones((N_LAYERS, 1, D_MODEL), jnp.float32),
        "win": w(keys[4], (N_LAYERS, D_MODEL, 2 * D_FF)),
        "wout": w(keys[5], (N_LAYERS, D_FF, D_MODEL)),
        "final_ln": jnp.ones((1, D_MODEL), jnp.float32),
    }


def t5_encoder_forward(params, tokens):
    """FrozenT5Embedder.forward: tokens -> last_hidden_state [B, S, D]."""
    B, S = tokens.shape
    # Embedding gather (plain JAX); T5 has no sqrt(d) embedding scale.
    h0 = params["embed"][tokens].reshape(B * S, D_MODEL)
    # Layer-0 relative-position bias, shared across all layers (HF behaviour).
    pos_bias = compute_position_bias(params["rel_bias"], S)
    out = t5_encoder_stack(h0, pos_bias,
                           params["ln1"], params["wqkv"], params["wo"],
                           params["ln2"], params["win"], params["wout"],
                           params["final_ln"])
    return out.reshape(B, S, D_MODEL)                          # last_hidden_state


if __name__ == "__main__":
    key = jax.random.PRNGKey(0)
    pkey, tkey = jax.random.split(key)
    params = init_params(pkey)
    # Deterministic "tokenized" input ids, padded to max_length.
    tokens = jax.random.randint(tkey, (BATCH, MAX_LEN), 0, VOCAB, dtype=jnp.int32)

    z = jax.jit(t5_encoder_forward)(params, tokens)
    jax.block_until_ready(z)
    assert z.shape == (BATCH, MAX_LEN, D_MODEL) and z.dtype == jnp.float32
    print("KERNEL_OK")
</pallas_src>

<mosaic_0001>
module attributes {stable_mosaic.version = 11 : i64} {
  func.func @_t5_encoder_kernel(%arg0: i32, %arg1: memref<16x128xf32, #tpu.memory_space<vmem>>, %arg2: memref<4x8x8xf32, #tpu.memory_space<vmem>>, %arg3: memref<1x1x128xf32, #tpu.memory_space<vmem>>, %arg4: memref<1x128x384xbf16, #tpu.memory_space<vmem>>, %arg5: memref<1x128x128xbf16, #tpu.memory_space<vmem>>, %arg6: memref<1x1x128xf32, #tpu.memory_space<vmem>>, %arg7: memref<1x128x512xbf16, #tpu.memory_space<vmem>>, %arg8: memref<1x256x128xbf16, #tpu.memory_space<vmem>>, %arg9: memref<1x128xf32, #tpu.memory_space<vmem>>, %arg10: memref<16x128xf32, #tpu.memory_space<vmem>>, %arg11: memref<16x128xf32, #tpu.memory_space<vmem>>) attributes {dimension_semantics = [#tpu.dimension_semantics<arbitrary>], iteration_bounds = array<i64: 2>, scalar_prefetch = 0 : i64, scratch_operands = 1 : i64, tpu.core_type = #tpu.core_type<tc>, window_params = [{pipeline_mode = #tpu.pipeline_mode<synchronous>, transform_indices = @transform_0, window_bounds = array<i64: 16, 128>}, {pipeline_mode = #tpu.pipeline_mode<synchronous>, transform_indices = @transform_1, window_bounds = array<i64: 4, 8, 8>}, {transform_indices = @transform_2, window_bounds = array<i64: 1, 1, 128>}, {transform_indices = @transform_3, window_bounds = array<i64: 1, 128, 384>}, {transform_indices = @transform_4, window_bounds = array<i64: 1, 128, 128>}, {transform_indices = @transform_5, window_bounds = array<i64: 1, 1, 128>}, {transform_indices = @transform_6, window_bounds = array<i64: 1, 128, 512>}, {transform_indices = @transform_7, window_bounds = array<i64: 1, 256, 128>}, {pipeline_mode = #tpu.pipeline_mode<synchronous>, transform_indices = @transform_8, window_bounds = array<i64: 1, 128>}, {pipeline_mode = #tpu.pipeline_mode<synchronous>, transform_indices = @transform_9, window_bounds = array<i64: 16, 128>}]} {
    %c0_i32 = arith.constant 0 : i32
    %0 = arith.cmpi eq, %arg0, %c0_i32 : i32
    %1 = arith.extui %0 : i1 to i32
    %c0_i32_0 = arith.constant 0 : i32
    %2 = arith.cmpi ne, %1, %c0_i32_0 : i32
    scf.if %2 {
      %c0_89 = arith.constant 0 : index
      %c0_90 = arith.constant 0 : index
      %258 = vector.load %arg1[%c0_89, %c0_90] : memref<16x128xf32, #tpu.memory_space<vmem>>, vector<16x128xf32>
      %c0_91 = arith.constant 0 : index
      %c0_92 = arith.constant 0 : index
      %259 = vector.load %arg11[%c0_91, %c0_92] : memref<16x128xf32, #tpu.memory_space<vmem>>, vector<16x128xf32>
      tpu.vector_store %arg11[%c0_91, %c0_92], %258 {strides = array<i32>} : memref<16x128xf32, #tpu.memory_space<vmem>>, vector<16x128xf32>,
    } else {
    }
    %c0 = arith.constant 0 : index
    %c0_1 = arith.constant 0 : index
    %3 = vector.load %arg11[%c0, %c0_1] : memref<16x128xf32, #tpu.memory_space<vmem>>, vector<16x128xf32>
    %c0_2 = arith.constant 0 : index
    %c0_3 = arith.constant 0 : index
    %c0_4 = arith.constant 0 : index
    %4 = vector.load %arg3[%c0_2, %c0_3, %c0_4] : memref<1x1x128xf32, #tpu.memory_space<vmem>>, vector<1x1x128xf32>
    %5 = vector.shape_cast %4 : vector<1x1x128xf32> to vector<1x128xf32>
    %6 = arith.mulf %3, %3 : vector<16x128xf32>
    %cst = arith.constant dense<0.000000e+00> : vector<16xf32>
    %7 = vector.multi_reduction <add>, %6, %cst [1] : vector<16x128xf32> to vector<16xf32>
    %8 = vector.shape_cast %7 : vector<16xf32> to vector<16x1xf32>
    %cst_5 = arith.constant 1.280000e+02 : f32
    %9 = vector.broadcast %cst_5 : f32 to vector<16x1xf32>
    %10 = arith.divf %8, %9 : vector<16x1xf32>
    %cst_6 = arith.constant 9.99999997E-7 : f32
    %11 = vector.broadcast %cst_6 : f32 to vector<16x1xf32>
    %12 = arith.addf %10, %11 : vector<16x1xf32>
    %13 = math.rsqrt %12 : vector<16x1xf32>
    %14 = vector.broadcast %13 : vector<16x1xf32> to vector<16x128xf32>
    %15 = arith.mulf %3, %14 : vector<16x128xf32>
    %16 = vector.broadcast %5 : vector<1x128xf32> to vector<16x128xf32>
    %17 = arith.mulf %15, %16 : vector<16x128xf32>
    %18 = arith.truncf %17 : vector<16x128xf32> to vector<16x128xbf16>
    %c0_7 = arith.constant 0 : index
    %c0_8 = arith.constant 0 : index
    %c0_9 = arith.constant 0 : index
    %19 = vector.load %arg4[%c0_7, %c0_8, %c0_9] : memref<1x128x384xbf16, #tpu.memory_space<vmem>>, vector<1x128x384xbf16>
    %20 = vector.shape_cast %19 : vector<1x128x384xbf16> to vector<128x384xbf16>
    %cst_10 = arith.constant dense<0.000000e+00> : vector<16x384xf32>
    %21 = tpu.matmul %18, %20, %cst_10 {dimension_numbers = #tpu.dot_dimension_numbers<[1], [0], [0], [1], [0, 0, 1, 1], [], []>} : vector<16x128xbf16>, vector<128x384xbf16>, vector<16x384xf32> -> vector<16x384xf32>
    %22 = vector.extract_strided_slice %21 {offsets = [0, 0], sizes = [16, 128], strides = [1, 1]} : vector<16x384xf32> to vector<16x128xf32>
    %23 = vector.extract_strided_slice %21 {offsets = [0, 128], sizes = [16, 128], strides = [1, 1]} : vector<16x384xf32> to vector<16x128xf32>
    %24 = vector.extract_strided_slice %21 {offsets = [0, 256], sizes = [16, 128], strides = [1, 1]} : vector<16x384xf32> to vector<16x128xf32>
    %25 = vector.extract_strided_slice %22 {offsets = [0, 0], sizes = [8, 128], strides = [1, 1]} : vector<16x128xf32> to vector<8x128xf32>
    %26 = vector.extract_strided_slice %23 {offsets = [0, 0], sizes = [8, 128], strides = [1, 1]} : vector<16x128xf32> to vector<8x128xf32>
    %27 = vector.extract_strided_slice %24 {offsets = [0, 0], sizes = [8, 128], strides = [1, 1]} : vector<16x128xf32> to vector<8x128xf32>
    %28 = vector.extract_strided_slice %25 {offsets = [0, 0], sizes = [8, 32], strides = [1, 1]} : vector<8x128xf32> to vector<8x32xf32>
    %29 = arith.truncf %28 : vector<8x32xf32> to vector<8x32xbf16>
    %30 = vector.extract_strided_slice %26 {offsets = [0, 0], sizes = [8, 32], strides = [1, 1]} : vector<8x128xf32> to vector<8x32xf32>
    %31 = arith.truncf %30 : vector<8x32xf32> to vector<8x32xbf16>
    %32 = vector.extract_strided_slice %27 {offsets = [0, 0], sizes = [8, 32], strides = [1, 1]} : vector<8x128xf32> to vector<8x32xf32>
    %33 = arith.truncf %32 : vector<8x32xf32> to vector<8x32xbf16>
    %cst_11 = arith.constant dense<0.000000e+00> : vector<8x8xf32>
    %34 = tpu.matmul %29, %31, %cst_11 {dimension_numbers = #tpu.dot_dimension_numbers<[1], [1], [0], [0], [0, 0, 1, 0], [], []>} : vector<8x32xbf16>, vector<8x32xbf16>, vector<8x8xf32> -> vector<8x8xf32>
    %c0_12 = arith.constant 0 : index
    %c0_13 = arith.constant 0 : index
    %c0_14 = arith.constant 0 : index
    %35 = vector.load %arg2[%c0_12, %c0_13, %c0_14] : memref<4x8x8xf32, #tpu.memory_space<vmem>>, vector<1x8x8xf32>
    %36 = vector.shape_cast %35 : vector<1x8x8xf32> to vector<8x8xf32>
    %37 = arith.addf %34, %36 : vector<8x8xf32>
    %cst_15 = arith.constant dense<0xFF800000> : vector<8xf32>
    %38 = vector.multi_reduction <maximumf>, %37, %cst_15 [1] : vector<8x8xf32> to vector<8xf32>
    %39 = vector.shape_cast %38 : vector<8xf32> to vector<8x1xf32>
    %40 = vector.broadcast %39 : vector<8x1xf32> to vector<8x8xf32>
    %41 = arith.subf %37, %40 : vector<8x8xf32>
    %42 = math.exp %41 : vector<8x8xf32>
    %cst_16 = arith.constant dense<0.000000e+00> : vector<8xf32>
    %43 = vector.multi_reduction <add>, %42, %cst_16 [1] : vector<8x8xf32> to vector<8xf32>
    %44 = vector.shape_cast %43 : vector<8xf32> to vector<8x1xf32>
    %45 = tpu.reciprocal %44 {approx = true} : vector<8x1xf32> -> vector<8x1xf32>
    %46 = vector.broadcast %45 : vector<8x1xf32> to vector<8x8xf32>
    %47 = arith.mulf %42, %46 : vector<8x8xf32>
    %48 = arith.truncf %47 : vector<8x8xf32> to vector<8x8xbf16>
    %cst_17 = arith.constant dense<0.000000e+00> : vector<8x32xf32>
    %49 = tpu.matmul %48, %33, %cst_17 {dimension_numbers = #tpu.dot_dimension_numbers<[1], [0], [0], [1], [0, 0, 1, 1], [], []>} : vector<8x8xbf16>, vector<8x32xbf16>, vector<8x32xf32> -> vector<8x32xf32>
    %50 = vector.extract_strided_slice %25 {offsets = [0, 32], sizes = [8, 32], strides = [1, 1]} : vector<8x128xf32> to vector<8x32xf32>
    %51 = arith.truncf %50 : vector<8x32xf32> to vector<8x32xbf16>
    %52 = vector.extract_strided_slice %26 {offsets = [0, 32], sizes = [8, 32], strides = [1, 1]} : vector<8x128xf32> to vector<8x32xf32>
    %53 = arith.truncf %52 : vector<8x32xf32> to vector<8x32xbf16>
    %54 = vector.extract_strided_slice %27 {offsets = [0, 32], sizes = [8, 32], strides = [1, 1]} : vector<8x128xf32> to vector<8x32xf32>
    %55 = arith.truncf %54 : vector<8x32xf32> to vector<8x32xbf16>
    %cst_18 = arith.constant dense<0.000000e+00> : vector<8x8xf32>
    %56 = tpu.matmul %51, %53, %cst_18 {dimension_numbers = #tpu.dot_dimension_numbers<[1], [1], [0], [0], [0, 0, 1, 0], [], []>} : vector<8x32xbf16>, vector<8x32xbf16>, vector<8x8xf32> -> vector<8x8xf32>
    %c1 = arith.constant 1 : index
    %c0_19 = arith.constant 0 : index
    %c0_20 = arith.constant 0 : index
    %57 = vector.load %arg2[%c1, %c0_19, %c0_20] : memref<4x8x8xf32, #tpu.memory_space<vmem>>, vector<1x8x8xf32>
    %58 = vector.shape_cast %57 : vector<1x8x8xf32> to vector<8x8xf32>
    %59 = arith.addf %56, %58 : vector<8x8xf32>
    %cst_21 = arith.constant dense<0xFF800000> : vector<8xf32>
    %60 = vector.multi_reduction <maximumf>, %59, %cst_21 [1] : vector<8x8xf32> to vector<8xf32>
    %61 = vector.shape_cast %60 : vector<8xf32> to vector<8x1xf32>
    %62 = vector.broadcast %61 : vector<8x1xf32> to vector<8x8xf32>
    %63 = arith.subf %59, %62 : vector<8x8xf32>
    %64 = math.exp %63 : vector<8x8xf32>
    %cst_22 = arith.constant dense<0.000000e+00> : vector<8xf32>
    %65 = vector.multi_reduction <add>, %64, %cst_22 [1] : vector<8x8xf32> to vector<8xf32>
    %66 = vector.shape_cast %65 : vector<8xf32> to vector<8x1xf32>
    %67 = tpu.reciprocal %66 {approx = true} : vector<8x1xf32> -> vector<8x1xf32>
    %68 = vector.broadcast %67 : vector<8x1xf32> to vector<8x8xf32>
    %69 = arith.mulf %64, %68 : vector<8x8xf32>
    %70 = arith.truncf %69 : vector<8x8xf32> to vector<8x8xbf16>
    %cst_23 = arith.constant dense<0.000000e+00> : vector<8x32xf32>
    %71 = tpu.matmul %70, %55, %cst_23 {dimension_numbers = #tpu.dot_dimension_numbers<[1], [0], [0], [1], [0, 0, 1, 1], [], []>} : vector<8x8xbf16>, vector<8x32xbf16>, vector<8x32xf32> -> vector<8x32xf32>
    %72 = vector.extract_strided_slice %25 {offsets = [0, 64], sizes = [8, 32], strides = [1, 1]} : vector<8x128xf32> to vector<8x32xf32>
    %73 = arith.truncf %72 : vector<8x32xf32> to vector<8x32xbf16>
    %74 = vector.extract_strided_slice %26 {offsets = [0, 64], sizes = [8, 32], strides = [1, 1]} : vector<8x128xf32> to vector<8x32xf32>
    %75 = arith.truncf %74 : vector<8x32xf32> to vector<8x32xbf16>
    %76 = vector.extract_strided_slice %27 {offsets = [0, 64], sizes = [8, 32], strides = [1, 1]} : vector<8x128xf32> to vector<8x32xf32>
    %77 = arith.truncf %76 : vector<8x32xf32> to vector<8x32xbf16>
    %cst_24 = arith.constant dense<0.000000e+00> : vector<8x8xf32>
    %78 = tpu.matmul %73, %75, %cst_24 {dimension_numbers = #tpu.dot_dimension_numbers<[1], [1], [0], [0], [0, 0, 1, 0], [], []>} : vector<8x32xbf16>, vector<8x32xbf16>, vector<8x8xf32> -> vector<8x8xf32>
    %c2 = arith.constant 2 : index
    %c0_25 = arith.constant 0 : index
    %c0_26 = arith.constant 0 : index
    %79 = vector.load %arg2[%c2, %c0_25, %c0_26] : memref<4x8x8xf32, #tpu.memory_space<vmem>>, vector<1x8x8xf32>
    %80 = vector.shape_cast %79 : vector<1x8x8xf32> to vector<8x8xf32>
    %81 = arith.addf %78, %80 : vector<8x8xf32>
    %cst_27 = arith.constant dense<0xFF800000> : vector<8xf32>
    %82 = vector.multi_reduction <maximumf>, %81, %cst_27 [1] : vector<8x8xf32> to vector<8xf32>
    %83 = vector.shape_cast %82 : vector<8xf32> to vector<8x1xf32>
    %84 = vector.broadcast %83 : vector<8x1xf32> to vector<8x8xf32>
    %85 = arith.subf %81, %84 : vector<8x8xf32>
    %86 = math.exp %85 : vector<8x8xf32>
    %cst_28 = arith.constant dense<0.000000e+00> : vector<8xf32>
    %87 = vector.multi_reduction <add>, %86, %cst_28 [1] : vector<8x8xf32> to vector<8xf32>
    %88 = vector.shape_cast %87 : vector<8xf32> to vector<8x1xf32>
    %89 = tpu.reciprocal %88 {approx = true} : vector<8x1xf32> -> vector<8x1xf32>
    %90 = vector.broadcast %89 : vector<8x1xf32> to vector<8x8xf32>
    %91 = arith.mulf %86, %90 : vector<8x8xf32>
    %92 = arith.truncf %91 : vector<8x8xf32> to vector<8x8xbf16>
    %cst_29 = arith.constant dense<0.000000e+00> : vector<8x32xf32>
    %93 = tpu.matmul %92, %77, %cst_29 {dimension_numbers = #tpu.dot_dimension_numbers<[1], [0], [0], [1], [0, 0, 1, 1], [], []>} : vector<8x8xbf16>, vector<8x32xbf16>, vector<8x32xf32> -> vector<8x32xf32>
    %94 = vector.extract_strided_slice %25 {offsets = [0, 96], sizes = [8, 32], strides = [1, 1]} : vector<8x128xf32> to vector<8x32xf32>
    %95 = arith.truncf %94 : vector<8x32xf32> to vector<8x32xbf16>
    %96 = vector.extract_strided_slice %26 {offsets = [0, 96], sizes = [8, 32], strides = [1, 1]} : vector<8x128xf32> to vector<8x32xf32>
    %97 = arith.truncf %96 : vector<8x32xf32> to vector<8x32xbf16>
    %98 = vector.extract_strided_slice %27 {offsets = [0, 96], sizes = [8, 32], strides = [1, 1]} : vector<8x128xf32> to vector<8x32xf32>
    %99 = arith.truncf %98 : vector<8x32xf32> to vector<8x32xbf16>
    %cst_30 = arith.constant dense<0.000000e+00> : vector<8x8xf32>
    %100 = tpu.matmul %95, %97, %cst_30 {dimension_numbers = #tpu.dot_dimension_numbers<[1], [1], [0], [0], [0, 0, 1, 0], [], []>} : vector<8x32xbf16>, vector<8x32xbf16>, vector<8x8xf32> -> vector<8x8xf32>
    %c3 = arith.constant 3 : index
    %c0_31 = arith.constant 0 : index
    %c0_32 = arith.constant 0 : index
    %101 = vector.load %arg2[%c3, %c0_31, %c0_32] : memref<4x8x8xf32, #tpu.memory_space<vmem>>, vector<1x8x8xf32>
    %102 = vector.shape_cast %101 : vector<1x8x8xf32> to vector<8x8xf32>
    %103 = arith.addf %100, %102 : vector<8x8xf32>
    %cst_33 = arith.constant dense<0xFF800000> : vector<8xf32>
    %104 = vector.multi_reduction <maximumf>, %103, %cst_33 [1] : vector<8x8xf32> to vector<8xf32>
    %105 = vector.shape_cast %104 : vector<8xf32> to vector<8x1xf32>
    %106 = vector.broadcast %105 : vector<8x1xf32> to vector<8x8xf32>
    %107 = arith.subf %103, %106 : vector<8x8xf32>
    %108 = math.exp %107 : vector<8x8xf32>
    %cst_34 = arith.constant dense<0.000000e+00> : vector<8xf32>
    %109 = vector.multi_reduction <add>, %108, %cst_34 [1] : vector<8x8xf32> to vector<8xf32>
    %110 = vector.shape_cast %109 : vector<8xf32> to vector<8x1xf32>
    %111 = tpu.reciprocal %110 {approx = true} : vector<8x1xf32> -> vector<8x1xf32>
    %112 = vector.broadcast %111 : vector<8x1xf32> to vector<8x8xf32>
    %113 = arith.mulf %108, %112 : vector<8x8xf32>
    %114 = arith.truncf %113 : vector<8x8xf32> to vector<8x8xbf16>
    %cst_35 = arith.constant dense<0.000000e+00> : vector<8x32xf32>
    %115 = tpu.matmul %114, %99, %cst_35 {dimension_numbers = #tpu.dot_dimension_numbers<[1], [0], [0], [1], [0, 0, 1, 1], [], []>} : vector<8x8xbf16>, vector<8x32xbf16>, vector<8x32xf32> -> vector<8x32xf32>
    %116 = tpu.concatenate %49, %71, %93, %115 in 1 : vector<8x32xf32>, vector<8x32xf32>, vector<8x32xf32>, vector<8x32xf32> -> vector<8x128xf32>
    %117 = vector.extract_strided_slice %22 {offsets = [8, 0], sizes = [8, 128], strides = [1, 1]} : vector<16x128xf32> to vector<8x128xf32>
    %118 = vector.extract_strided_slice %23 {offsets = [8, 0], sizes = [8, 128], strides = [1, 1]} : vector<16x128xf32> to vector<8x128xf32>
    %119 = vector.extract_strided_slice %24 {offsets = [8, 0], sizes = [8, 128], strides = [1, 1]} : vector<16x128xf32> to vector<8x128xf32>
    %120 = vector.extract_strided_slice %117 {offsets = [0, 0], sizes = [8, 32], strides = [1, 1]} : vector<8x128xf32> to vector<8x32xf32>
    %121 = arith.truncf %120 : vector<8x32xf32> to vector<8x32xbf16>
    %122 = vector.extract_strided_slice %118 {offsets = [0, 0], sizes = [8, 32], strides = [1, 1]} : vector<8x128xf32> to vector<8x32xf32>
    %123 = arith.truncf %122 : vector<8x32xf32> to vector<8x32xbf16>
    %124 = vector.extract_strided_slice %119 {offsets = [0, 0], sizes = [8, 32], strides = [1, 1]} : vector<8x128xf32> to vector<8x32xf32>
    %125 = arith.truncf %124 : vector<8x32xf32> to vector<8x32xbf16>
    %cst_36 = arith.constant dense<0.000000e+00> : vector<8x8xf32>
    %126 = tpu.matmul %121, %123, %cst_36 {dimension_numbers = #tpu.dot_dimension_numbers<[1], [1], [0], [0], [0, 0, 1, 0], [], []>} : vector<8x32xbf16>, vector<8x32xbf16>, vector<8x8xf32> -> vector<8x8xf32>
    %c0_37 = arith.constant 0 : index
    %c0_38 = arith.constant 0 : index
    %c0_39 = arith.constant 0 : index
    %127 = vector.load %arg2[%c0_37, %c0_38, %c0_39] : memref<4x8x8xf32, #tpu.memory_space<vmem>>, vector<1x8x8xf32>
    %128 = vector.shape_cast %127 : vector<1x8x8xf32> to vector<8x8xf32>
    %129 = arith.addf %126, %128 : vector<8x8xf32>
    %cst_40 = arith.constant dense<0xFF800000> : vector<8xf32>
    %130 = vector.multi_reduction <maximumf>, %129, %cst_40 [1] : vector<8x8xf32> to vector<8xf32>
    %131 = vector.shape_cast %130 : vector<8xf32> to vector<8x1xf32>
    %132 = vector.broadcast %131 : vector<8x1xf32> to vector<8x8xf32>
    %133 = arith.subf %129, %132 : vector<8x8xf32>
    %134 = math.exp %133 : vector<8x8xf32>
    %cst_41 = arith.constant dense<0.000000e+00> : vector<8xf32>
    %135 = vector.multi_reduction <add>, %134, %cst_41 [1] : vector<8x8xf32> to vector<8xf32>
    %136 = vector.shape_cast %135 : vector<8xf32> to vector<8x1xf32>
    %137 = tpu.reciprocal %136 {approx = true} : vector<8x1xf32> -> vector<8x1xf32>
    %138 = vector.broadcast %137 : vector<8x1xf32> to vector<8x8xf32>
    %139 = arith.mulf %134, %138 : vector<8x8xf32>
    %140 = arith.truncf %139 : vector<8x8xf32> to vector<8x8xbf16>
    %cst_42 = arith.constant dense<0.000000e+00> : vector<8x32xf32>
    %141 = tpu.matmul %140, %125, %cst_42 {dimension_numbers = #tpu.dot_dimension_numbers<[1], [0], [0], [1], [0, 0, 1, 1], [], []>} : vector<8x8xbf16>, vector<8x32xbf16>, vector<8x32xf32> -> vector<8x32xf32>
    %142 = vector.extract_strided_slice %117 {offsets = [0, 32], sizes = [8, 32], strides = [1, 1]} : vector<8x128xf32> to vector<8x32xf32>
    %143 = arith.truncf %142 : vector<8x32xf32> to vector<8x32xbf16>
    %144 = vector.extract_strided_slice %118 {offsets = [0, 32], sizes = [8, 32], strides = [1, 1]} : vector<8x128xf32> to vector<8x32xf32>
    %145 = arith.truncf %144 : vector<8x32xf32> to vector<8x32xbf16>
    %146 = vector.extract_strided_slice %119 {offsets = [0, 32], sizes = [8, 32], strides = [1, 1]} : vector<8x128xf32> to vector<8x32xf32>
    %147 = arith.truncf %146 : vector<8x32xf32> to vector<8x32xbf16>
    %cst_43 = arith.constant dense<0.000000e+00> : vector<8x8xf32>
    %148 = tpu.matmul %143, %145, %cst_43 {dimension_numbers = #tpu.dot_dimension_numbers<[1], [1], [0], [0], [0, 0, 1, 0], [], []>} : vector<8x32xbf16>, vector<8x32xbf16>, vector<8x8xf32> -> vector<8x8xf32>
    %c1_44 = arith.constant 1 : index
    %c0_45 = arith.constant 0 : index
    %c0_46 = arith.constant 0 : index
    %149 = vector.load %arg2[%c1_44, %c0_45, %c0_46] : memref<4x8x8xf32, #tpu.memory_space<vmem>>, vector<1x8x8xf32>
    %150 = vector.shape_cast %149 : vector<1x8x8xf32> to vector<8x8xf32>
    %151 = arith.addf %148, %150 : vector<8x8xf32>
    %cst_47 = arith.constant dense<0xFF800000> : vector<8xf32>
    %152 = vector.multi_reduction <maximumf>, %151, %cst_47 [1] : vector<8x8xf32> to vector<8xf32>
    %153 = vector.shape_cast %152 : vector<8xf32> to vector<8x1xf32>
    %154 = vector.broadcast %153 : vector<8x1xf32> to vector<8x8xf32>
    %155 = arith.subf %151, %154 : vector<8x8xf32>
    %156 = math.exp %155 : vector<8x8xf32>
    %cst_48 = arith.constant dense<0.000000e+00> : vector<8xf32>
    %157 = vector.multi_reduction <add>, %156, %cst_48 [1] : vector<8x8xf32> to vector<8xf32>
    %158 = vector.shape_cast %157 : vector<8xf32> to vector<8x1xf32>
    %159 = tpu.reciprocal %158 {approx = true} : vector<8x1xf32> -> vector<8x1xf32>
    %160 = vector.broadcast %159 : vector<8x1xf32> to vector<8x8xf32>
    %161 = arith.mulf %156, %160 : vector<8x8xf32>
    %162 = arith.truncf %161 : vector<8x8xf32> to vector<8x8xbf16>
    %cst_49 = arith.constant dense<0.000000e+00> : vector<8x32xf32>
    %163 = tpu.matmul %162, %147, %cst_49 {dimension_numbers = #tpu.dot_dimension_numbers<[1], [0], [0], [1], [0, 0, 1, 1], [], []>} : vector<8x8xbf16>, vector<8x32xbf16>, vector<8x32xf32> -> vector<8x32xf32>
    %164 = vector.extract_strided_slice %117 {offsets = [0, 64], sizes = [8, 32], strides = [1, 1]} : vector<8x128xf32> to vector<8x32xf32>
    %165 = arith.truncf %164 : vector<8x32xf32> to vector<8x32xbf16>
    %166 = vector.extract_strided_slice %118 {offsets = [0, 64], sizes = [8, 32], strides = [1, 1]} : vector<8x128xf32> to vector<8x32xf32>
    %167 = arith.truncf %166 : vector<8x32xf32> to vector<8x32xbf16>
    %168 = vector.extract_strided_slice %119 {offsets = [0, 64], sizes = [8, 32], strides = [1, 1]} : vector<8x128xf32> to vector<8x32xf32>
    %169 = arith.truncf %168 : vector<8x32xf32> to vector<8x32xbf16>
    %cst_50 = arith.constant dense<0.000000e+00> : vector<8x8xf32>
    %170 = tpu.matmul %165, %167, %cst_50 {dimension_numbers = #tpu.dot_dimension_numbers<[1], [1], [0], [0], [0, 0, 1, 0], [], []>} : vector<8x32xbf16>, vector<8x32xbf16>, vector<8x8xf32> -> vector<8x8xf32>
    %c2_51 = arith.constant 2 : index
    %c0_52 = arith.constant 0 : index
    %c0_53 = arith.constant 0 : index
    %171 = vector.load %arg2[%c2_51, %c0_52, %c0_53] : memref<4x8x8xf32, #tpu.memory_space<vmem>>, vector<1x8x8xf32>
    %172 = vector.shape_cast %171 : vector<1x8x8xf32> to vector<8x8xf32>
    %173 = arith.addf %170, %172 : vector<8x8xf32>
    %cst_54 = arith.constant dense<0xFF800000> : vector<8xf32>
    %174 = vector.multi_reduction <maximumf>, %173, %cst_54 [1] : vector<8x8xf32> to vector<8xf32>
    %175 = vector.shape_cast %174 : vector<8xf32> to vector<8x1xf32>
    %176 = vector.broadcast %175 : vector<8x1xf32> to vector<8x8xf32>
    %177 = arith.subf %173, %176 : vector<8x8xf32>
    %178 = math.exp %177 : vector<8x8xf32>
    %cst_55 = arith.constant dense<0.000000e+00> : vector<8xf32>
    %179 = vector.multi_reduction <add>, %178, %cst_55 [1] : vector<8x8xf32> to vector<8xf32>
    %180 = vector.shape_cast %179 : vector<8xf32> to vector<8x1xf32>
    %181 = tpu.reciprocal %180 {approx = true} : vector<8x1xf32> -> vector<8x1xf32>
    %182 = vector.broadcast %181 : vector<8x1xf32> to vector<8x8xf32>
    %183 = arith.mulf %178, %182 : vector<8x8xf32>
    %184 = arith.truncf %183 : vector<8x8xf32> to vector<8x8xbf16>
    %cst_56 = arith.constant dense<0.000000e+00> : vector<8x32xf32>
    %185 = tpu.matmul %184, %169, %cst_56 {dimension_numbers = #tpu.dot_dimension_numbers<[1], [0], [0], [1], [0, 0, 1, 1], [], []>} : vector<8x8xbf16>, vector<8x32xbf16>, vector<8x32xf32> -> vector<8x32xf32>
    %186 = vector.extract_strided_slice %117 {offsets = [0, 96], sizes = [8, 32], strides = [1, 1]} : vector<8x128xf32> to vector<8x32xf32>
    %187 = arith.truncf %186 : vector<8x32xf32> to vector<8x32xbf16>
    %188 = vector.extract_strided_slice %118 {offsets = [0, 96], sizes = [8, 32], strides = [1, 1]} : vector<8x128xf32> to vector<8x32xf32>
    %189 = arith.truncf %188 : vector<8x32xf32> to vector<8x32xbf16>
    %190 = vector.extract_strided_slice %119 {offsets = [0, 96], sizes = [8, 32], strides = [1, 1]} : vector<8x128xf32> to vector<8x32xf32>
    %191 = arith.truncf %190 : vector<8x32xf32> to vector<8x32xbf16>
    %cst_57 = arith.constant dense<0.000000e+00> : vector<8x8xf32>
    %192 = tpu.matmul %187, %189, %cst_57 {dimension_numbers = #tpu.dot_dimension_numbers<[1], [1], [0], [0], [0, 0, 1, 0], [], []>} : vector<8x32xbf16>, vector<8x32xbf16>, vector<8x8xf32> -> vector<8x8xf32>
    %c3_58 = arith.constant 3 : index
    %c0_59 = arith.constant 0 : index
    %c0_60 = arith.constant 0 : index
    %193 = vector.load %arg2[%c3_58, %c0_59, %c0_60] : memref<4x8x8xf32, #tpu.memory_space<vmem>>, vector<1x8x8xf32>
    %194 = vector.shape_cast %193 : vector<1x8x8xf32> to vector<8x8xf32>
    %195 = arith.addf %192, %194 : vector<8x8xf32>
    %cst_61 = arith.constant dense<0xFF800000> : vector<8xf32>
    %196 = vector.multi_reduction <maximumf>, %195, %cst_61 [1] : vector<8x8xf32> to vector<8xf32>
    %197 = vector.shape_cast %196 : vector<8xf32> to vector<8x1xf32>
    %198 = vector.broadcast %197 : vector<8x1xf32> to vector<8x8xf32>
    %199 = arith.subf %195, %198 : vector<8x8xf32>
    %200 = math.exp %199 : vector<8x8xf32>
    %cst_62 = arith.constant dense<0.000000e+00> : vector<8xf32>
    %201 = vector.multi_reduction <add>, %200, %cst_62 [1] : vector<8x8xf32> to vector<8xf32>
    %202 = vector.shape_cast %201 : vector<8xf32> to vector<8x1xf32>
    %203 = tpu.reciprocal %202 {approx = true} : vector<8x1xf32> -> vector<8x1xf32>
    %204 = vector.broadcast %203 : vector<8x1xf32> to vector<8x8xf32>
    %205 = arith.mulf %200, %204 : vector<8x8xf32>
    %206 = arith.truncf %205 : vector<8x8xf32> to vector<8x8xbf16>
    %cst_63 = arith.constant dense<0.000000e+00> : vector<8x32xf32>
    %207 = tpu.matmul %206, %191, %cst_63 {dimension_numbers = #tpu.dot_dimension_numbers<[1], [0], [0], [1], [0, 0, 1, 1], [], []>} : vector<8x8xbf16>, vector<8x32xbf16>, vector<8x32xf32> -> vector<8x32xf32>
    %208 = tpu.concatenate %141, %163, %185, %207 in 1 : vector<8x32xf32>, vector<8x32xf32>, vector<8x32xf32>, vector<8x32xf32> -> vector<8x128xf32>
    %209 = tpu.concatenate %116, %208 in 0 : vector<8x128xf32>, vector<8x128xf32> -> vector<16x128xf32>
    %210 = arith.truncf %209 : vector<16x128xf32> to vector<16x128xbf16>
    %c0_64 = arith.constant 0 : index
    %c0_65 = arith.constant 0 : index
    %c0_66 = arith.constant 0 : index
    %211 = vector.load %arg5[%c0_64, %c0_65, %c0_66] : memref<1x128x128xbf16, #tpu.memory_space<vmem>>, vector<1x128x128xbf16>
    %212 = vector.shape_cast %211 : vector<1x128x128xbf16> to vector<128x128xbf16>
    %cst_67 = arith.constant dense<0.000000e+00> : vector<16x128xf32>
    %213 = tpu.matmul %210, %212, %cst_67 {dimension_numbers = #tpu.dot_dimension_numbers<[1], [0], [0], [1], [0, 0, 1, 1], [], []>} : vector<16x128xbf16>, vector<128x128xbf16>, vector<16x128xf32> -> vector<16x128xf32>
    %214 = arith.addf %3, %213 : vector<16x128xf32>
    %c0_68 = arith.constant 0 : index
    %c0_69 = arith.constant 0 : index
    %c0_70 = arith.constant 0 : index
    %215 = vector.load %arg6[%c0_68, %c0_69, %c0_70] : memref<1x1x128xf32, #tpu.memory_space<vmem>>, vector<1x1x128xf32>
    %216 = vector.shape_cast %215 : vector<1x1x128xf32> to vector<1x128xf32>
    %217 = arith.mulf %214, %214 : vector<16x128xf32>
    %cst_71 = arith.constant dense<0.000000e+00> : vector<16xf32>
    %218 = vector.multi_reduction <add>, %217, %cst_71 [1] : vector<16x128xf32> to vector<16xf32>
    %219 = vector.shape_cast %218 : vector<16xf32> to vector<16x1xf32>
    %cst_72 = arith.constant 1.280000e+02 : f32
    %220 = vector.broadcast %cst_72 : f32 to vector<16x1xf32>
    %221 = arith.divf %219, %220 : vector<16x1xf32>
    %cst_73 = arith.constant 9.99999997E-7 : f32
    %222 = vector.broadcast %cst_73 : f32 to vector<16x1xf32>
    %223 = arith.addf %221, %222 : vector<16x1xf32>
    %224 = math.rsqrt %223 : vector<16x1xf32>
    %225 = vector.broadcast %224 : vector<16x1xf32> to vector<16x128xf32>
    %226 = arith.mulf %214, %225 : vector<16x128xf32>
    %227 = vector.broadcast %216 : vector<1x128xf32> to vector<16x128xf32>
    %228 = arith.mulf %226, %227 : vector<16x128xf32>
    %229 = arith.truncf %228 : vector<16x128xf32> to vector<16x128xbf16>
    %c0_74 = arith.constant 0 : index
    %c0_75 = arith.constant 0 : index
    %c0_76 = arith.constant 0 : index
    %230 = vector.load %arg7[%c0_74, %c0_75, %c0_76] : memref<1x128x512xbf16, #tpu.memory_space<vmem>>, vector<1x128x512xbf16>
    %231 = vector.shape_cast %230 : vector<1x128x512xbf16> to vector<128x512xbf16>
    %cst_77 = arith.constant dense<0.000000e+00> : vector<16x512xf32>
    %232 = tpu.matmul %229, %231, %cst_77 {dimension_numbers = #tpu.dot_dimension_numbers<[1], [0], [0], [1], [0, 0, 1, 1], [], []>} : vector<16x128xbf16>, vector<128x512xbf16>, vector<16x512xf32> -> vector<16x512xf32>
    %233 = vector.extract_strided_slice %232 {offsets = [0, 0], sizes = [16, 256], strides = [1, 1]} : vector<16x512xf32> to vector<16x256xf32>
    %234 = vector.extract_strided_slice %232 {offsets = [0, 256], sizes = [16, 256], strides = [1, 1]} : vector<16x512xf32> to vector<16x256xf32>
    %cst_78 = arith.constant 5.000000e-01 : f32
    %235 = vector.broadcast %cst_78 : f32 to vector<16x256xf32>
    %236 = arith.mulf %235, %233 : vector<16x256xf32>
    %cst_79 = arith.constant 4.471500e-02 : f32
    %237 = vector.broadcast %cst_79 : f32 to vector<16x256xf32>
    %238 = arith.mulf %237, %233 : vector<16x256xf32>
    %239 = arith.mulf %238, %233 : vector<16x256xf32>
    %240 = arith.mulf %239, %233 : vector<16x256xf32>
    %241 = arith.addf %233, %240 : vector<16x256xf32>
    %cst_80 = arith.constant 0.797884583 : f32
    %242 = vector.broadcast %cst_80 : f32 to vector<16x256xf32>
    %243 = arith.mulf %242, %241 : vector<16x256xf32>
    %244 = math.tanh %243 : vector<16x256xf32>
    %cst_81 = arith.constant 1.000000e+00 : f32
    %245 = vector.broadcast %cst_81 : f32 to vector<16x256xf32>
    %246 = arith.addf %245, %244 : vector<16x256xf32>
    %247 = arith.mulf %236, %246 : vector<16x256xf32>
    %248 = arith.mulf %247, %234 : vector<16x256xf32>
    %249 = arith.truncf %248 : vector<16x256xf32> to vector<16x256xbf16>
    %c0_82 = arith.constant 0 : index
    %c0_83 = arith.constant 0 : index
    %c0_84 = arith.constant 0 : index
    %250 = vector.load %arg8[%c0_82, %c0_83, %c0_84] : memref<1x256x128xbf16, #tpu.memory_space<vmem>>, vector<1x256x128xbf16>
    %251 = vector.shape_cast %250 : vector<1x256x128xbf16> to vector<256x128xbf16>
    %cst_85 = arith.constant dense<0.000000e+00> : vector<16x128xf32>
    %252 = tpu.matmul %249, %251, %cst_85 {dimension_numbers = #tpu.dot_dimension_numbers<[1], [0], [0], [1], [0, 0, 1, 1], [], []>} : vector<16x256xbf16>, vector<256x128xbf16>, vector<16x128xf32> -> vector<16x128xf32>
    %253 = arith.addf %214, %252 : vector<16x128xf32>
    %c0_86 = arith.constant 0 : index
    %c0_87 = arith.constant 0 : index
    %254 = vector.load %arg11[%c0_86, %c0_87] : memref<16x128xf32, #tpu.memory_space<vmem>>, vector<16x128xf32>
    tpu.vector_store %arg11[%c0_86, %c0_87], %253 {strides = array<i32>} : memref<16x128xf32, #tpu.memory_space<vmem>>, vector<16x128xf32>,
    %c1_i32 = arith.constant 1 : i32
    %255 = arith.cmpi eq, %arg0, %c1_i32 : i32
    %256 = arith.extui %255 : i1 to i32
    %c0_i32_88 = arith.constant 0 : i32
    %257 = arith.cmpi ne, %256, %c0_i32_88 : i32
    scf.if %257 {
      %c0_89 = arith.constant 0 : index
      %c0_90 = arith.constant 0 : index
      %258 = vector.load %arg9[%c0_89, %c0_90] : memref<1x128xf32, #tpu.memory_space<vmem>>, vector<1x128xf32>
      %259 = arith.mulf %253, %253 : vector<16x128xf32>
      %cst_91 = arith.constant dense<0.000000e+00> : vector<16xf32>
      %260 = vector.multi_reduction <add>, %259, %cst_91 [1] : vector<16x128xf32> to vector<16xf32>
      %261 = vector.shape_cast %260 : vector<16xf32> to vector<16x1xf32>
      %cst_92 = arith.constant 1.280000e+02 : f32
      %262 = vector.broadcast %cst_92 : f32 to vector<16x1xf32>
      %263 = arith.divf %261, %262 : vector<16x1xf32>
      %cst_93 = arith.constant 9.99999997E-7 : f32
      %264 = vector.broadcast %cst_93 : f32 to vector<16x1xf32>
      %265 = arith.addf %263, %264 : vector<16x1xf32>
      %266 = math.rsqrt %265 : vector<16x1xf32>
      %267 = vector.broadcast %266 : vector<16x1xf32> to vector<16x128xf32>
      %268 = arith.mulf %253, %267 : vector<16x128xf32>
      %269 = vector.broadcast %258 : vector<1x128xf32> to vector<16x128xf32>
      %270 = arith.mulf %268, %269 : vector<16x128xf32>
      %c0_94 = arith.constant 0 : index
      %c0_95 = arith.constant 0 : index
      %271 = vector.load %arg10[%c0_94, %c0_95] : memref<16x128xf32, #tpu.memory_space<vmem>>, vector<16x128xf32>
      tpu.vector_store %arg10[%c0_94, %c0_95], %270 {strides = array<i32>} : memref<16x128xf32, #tpu.memory_space<vmem>>, vector<16x128xf32>,
    } else {
    }
    return
  }
  func.func @transform_0(%arg0: i32) -> (i32, i32) {
    %c0_i32 = arith.constant 0 : i32
    %c0_i32_0 = arith.constant 0 : i32
    %c0_i32_1 = arith.constant 0 : i32
    return %c0_i32, %c0_i32_0 : i32, i32
  }
  func.func @transform_1(%arg0: i32) -> (i32, i32, i32) {
    %c0_i32 = arith.constant 0 : i32
    %c0_i32_0 = arith.constant 0 : i32
    %c0_i32_1 = arith.constant 0 : i32
    %c0_i32_2 = arith.constant 0 : i32
    return %c0_i32, %c0_i32_0, %c0_i32_1 : i32, i32, i32
  }
  func.func @transform_2(%arg0: i32) -> (i32, i32, i32) {
    %c0_i32 = arith.constant 0 : i32
    %c0_i32_0 = arith.constant 0 : i32
    %c0_i32_1 = arith.constant 0 : i32
    return %arg0, %c0_i32, %c0_i32_0 : i32, i32, i32
  }
  func.func @transform_3(%arg0: i32) -> (i32, i32, i32) {
    %c0_i32 = arith.constant 0 : i32
    %c0_i32_0 = arith.constant 0 : i32
    %c0_i32_1 = arith.constant 0 : i32
    return %arg0, %c0_i32, %c0_i32_0 : i32, i32, i32
  }
  func.func @transform_4(%arg0: i32) -> (i32, i32, i32) {
    %c0_i32 = arith.constant 0 : i32
    %c0_i32_0 = arith.constant 0 : i32
    %c0_i32_1 = arith.constant 0 : i32
    return %arg0, %c0_i32, %c0_i32_0 : i32, i32, i32
  }
  func.func @transform_5(%arg0: i32) -> (i32, i32, i32) {
    %c0_i32 = arith.constant 0 : i32
    %c0_i32_0 = arith.constant 0 : i32
    %c0_i32_1 = arith.constant 0 : i32
    return %arg0, %c0_i32, %c0_i32_0 : i32, i32, i32
  }
  func.func @transform_6(%arg0: i32) -> (i32, i32, i32) {
    %c0_i32 = arith.constant 0 : i32
    %c0_i32_0 = arith.constant 0 : i32
    %c0_i32_1 = arith.constant 0 : i32
    return %arg0, %c0_i32, %c0_i32_0 : i32, i32, i32
  }
  func.func @transform_7(%arg0: i32) -> (i32, i32, i32) {
    %c0_i32 = arith.constant 0 : i32
    %c0_i32_0 = arith.constant 0 : i32
    %c0_i32_1 = arith.constant 0 : i32
    return %arg0, %c0_i32, %c0_i32_0 : i32, i32, i32
  }
  func.func @transform_8(%arg0: i32) -> (i32, i32) {
    %c0_i32 = arith.constant 0 : i32
    %c0_i32_0 = arith.constant 0 : i32
    %c0_i32_1 = arith.constant 0 : i32
    return %c0_i32, %c0_i32_0 : i32, i32
  }
  func.func @transform_9(%arg0: i32) -> (i32, i32) {
    %c0_i32 = arith.constant 0 : i32
    %c0_i32_0 = arith.constant 0 : i32
    %c0_i32_1 = arith.constant 0 : i32
    return %c0_i32, %c0_i32_0 : i32, i32
  }
}

</mosaic_0001>

<llo_original>
// kernel: t5_encoder_forward.1
$region0: #{t5_encoder_forward.1}
  #allocation0 [shape = 'u32[]', space=smem, size = 0x4, offset = 0x4, fixed_abs, tag = 'smem constant byte address 0x4 - core index']
  #allocation1 [shape = 'u32[72,128]{1,0:T(1,128)}', space=vmem, size = 0x9000, scoped, tag = 'internal scratch']
  #allocation2 [shape = 'f32[16,128]{1,0:T(8,128)}', space=vmem, size = 0x2000, scoped, tag = 'scratch operand']
  %s0 = inlined_call_operand.vmem [shape: f32[16,128], index: 0, kind: input, shape index: {}]
  %s1 = inlined_call_operand.vmem [shape: f32[4,8,8], index: 1, kind: input, shape index: {}]
  %s2 = inlined_call_operand.vmem [shape: f32[2,1,128], index: 2, kind: input, shape index: {}]
  %s3 = inlined_call_operand.hbm [shape: bf16[2,128,384], index: 3, kind: input, shape index: {}]
  %s4 = inlined_call_operand.vmem [shape: bf16[2,128,128], index: 4, kind: input, shape index: {}]
  %s5 = inlined_call_operand.vmem [shape: f32[2,1,128], index: 5, kind: input, shape index: {}]
  %s6 = inlined_call_operand.vmem [shape: bf16[2,128,512], index: 6, kind: input, shape index: {}]
  %s7 = inlined_call_operand.vmem [shape: bf16[2,256,128], index: 7, kind: input, shape index: {}]
  %s8 = inlined_call_operand.vmem [shape: f32[1,128], index: 8, kind: input, shape index: {}]
  %s9 = inlined_call_operand.hbm [shape: f32[16,128], index: 9, kind: output, shape index: {}]
  %s10 = sld [smem:[#allocation0]]
  $region81: #{t5_encoder_forward.1} parent=0
    _
  %s12 = ssub.s32 1, %s10
  %s13 = scalar_select 0, %s12, %s10
  $region1: #{t5_encoder_forward.1} parent=0
    #allocation3 [shape = 'u8[196608]{0}', space=vmem, size = 0x30000, scoped, tag = 'input window, operand 3']
    #allocation4 [shape = 's32[2]{0}', space=sflag, size = 0x8, scoped, tag = 'scoped memory for t5_encoder_forward.1']
    #allocation5 [shape = 's32[2]{0}', space=sflag, size = 0x8, scoped, tag = 'scoped memory for t5_encoder_forward.1']
    #allocation6 [shape = 'u8[8192]{0}', space=vmem, size = 0x2000, scoped, tag = 'output window, operand 0, single buffered']
    %14 = vsyncpa [#allocation4], 0
    %s15 = scalar_lea.sflag [#allocation4], 1
    %16 = vsyncpa %s15, 0
    %17 = vsyncpa [#allocation5], 0
    loop: start=0, step=1, limit=4
    $region2: #{t5_encoder_forward.1} parent=1 // loop_pre_header
      _
    $region3: #{t5_encoder_forward.1} parent=1 // loop_header
      %s19 = sphi 0, %s23
      %p20 = scmp.ge.s32.totalorder %s19, 4
      %s27 = sphi 0, %s27
      %s29 = sphi 0, %s27
      %s30 = sphi 0, %s29
      %s44 = sphi 0, %s30
      %s48 = sphi 0, %s48
      %s50 = sphi 0, %s48
      %s51 = sphi 0, %s50
      %s65 = sphi 0, %s51
      %s71 = sphi 0, %s73
      %s74 = sphi 0, %s71
      %s75 = sphi 0, %s74
      %s91 = sphi 0, %s75
      %s97 = sphi 0, %s99
      %s100 = sphi 0, %s97
      %s101 = sphi 0, %s100
      %s117 = sphi 0, %s101
      %s123 = sphi 0, %s125
      %s126 = sphi 0, %s123
      %s127 = sphi 0, %s126
      %s143 = sphi 0, %s127
      %s149 = sphi 0, %s151
      %s152 = sphi 0, %s149
      %s153 = sphi 0, %s152
      %s169 = sphi 0, %s153
      %s175 = sphi 0, %s177
      %s178 = sphi 0, %s175
      %s179 = sphi 0, %s178
      %s195 = sphi 0, %s179
      %s201 = sphi 0, %s203
      %s204 = sphi 0, %s201
      %s205 = sphi 0, %s204
      %s221 = sphi 0, %s205
      %s225 = sphi 0, %s225
      %s227 = sphi 0, %s225
      %s228 = sphi 0, %s227
      %s242 = sphi 0, %s228
      %s246 = sphi 0, %s246
      %s248 = sphi 0, %s246
      %s249 = sphi 0, %s248
      %s263 = sphi 0, %s249
    $region4: #{t5_encoder_forward.1} parent=1 // loop_header_branch
      %22 = sbr.rel (%p20) target = $region8
    $region5: #{t5_encoder_forward.1} parent=1 // loop_body
      %s24 = ssub.s32 %s19, 1
      %s25 = ssub.s32 %s19, 2
      %s26 = sadd.s32 %s19, 1
      %s28 = sadd.s32 %s27, 1
      %p31 = scmp.eq.s32.totalorder %s19, 1
      %p32 = scmp.ne.s32.totalorder %s27, %s29
      %p33 = scmp.eq.s32.totalorder %s19, 0
      %p34 = por %p32, %p33
      %p35 = scmp.ne.s32.totalorder %s27, %s29
      %p36 = scmp.eq.s32.totalorder %s24, 1
      %p37 = por %p35, %p36
      %p38 = scmp.ne.s32.totalorder %s29, %s30
      %p39 = scmp.eq.s32.totalorder %s24, 0
      %p40 = por %p38, %p39
      %p41 = scmp.ne.s32.totalorder %s29, %s30
      %p42 = scmp.eq.s32.totalorder %s25, 1
      %p43 = por %p41, %p42
      %p45 = scmp.ne.s32.totalorder %s30, %s44
      %p46 = scmp.eq.s32.totalorder %s25, 0
      %p47 = por %p45, %p46
      %s49 = sadd.s32 %s48, 1
      %p52 = scmp.eq.s32.totalorder %s19, 1
      %p53 = scmp.ne.s32.totalorder %s48, %s50
      %p54 = scmp.eq.s32.totalorder %s19, 0
      %p55 = por %p53, %p54
      %p56 = scmp.ne.s32.totalorder %s48, %s50
      %p57 = scmp.eq.s32.totalorder %s24, 1
      %p58 = por %p56, %p57
      %p59 = scmp.ne.s32.totalorder %s50, %s51
      %p60 = scmp.eq.s32.totalorder %s24, 0
      %p61 = por %p59, %p60
      %p62 = scmp.ne.s32.totalorder %s50, %s51
      %p63 = scmp.eq.s32.totalorder %s25, 1
      %p64 = por %p62, %p63
      %p66 = scmp.ne.s32.totalorder %s51, %s65
      %p67 = scmp.eq.s32.totalorder %s25, 0
      %p68 = por %p66, %p67
      %s69 = ssub.s32 %s19, %s26
      %p70 = scmp.eq.s32.totalorder %s69, 0
      %s72 = sadd.s32 %s71, 1
      %s73 = scalar_select %p70, %s71, %s72
      %p76 = pneg %p70
      %p77 = scmp.eq.s32.totalorder %s19, 1
      %p78 = por %p76, %p77
      %p79 = scmp.ne.s32.totalorder %s71, %s74
      %p80 = scmp.eq.s32.totalorder %s19, 0
      %p81 = por %p79, %p80
      %p82 = scmp.ne.s32.totalorder %s71, %s74
      %p83 = scmp.eq.s32.totalorder %s24, 1
      %p84 = por %p82, %p83
      %p85 = scmp.ne.s32.totalorder %s74, %s75
      %p86 = scmp.eq.s32.totalorder %s24, 0
      %p87 = por %p85, %p86
      %p88 = scmp.ne.s32.totalorder %s74, %s75
      %p89 = scmp.eq.s32.totalorder %s25, 1
      %p90 = por %p88, %p89
      %p92 = scmp.ne.s32.totalorder %s75, %s91
      %p93 = scmp.eq.s32.totalorder %s25, 0
      %p94 = por %p92, %p93
      %s95 = ssub.s32 %s19, %s26
      %p96 = scmp.eq.s32.totalorder %s95, 0
      %s98 = sadd.s32 %s97, 1
      %s99 = scalar_select %p96, %s97, %s98
      %p102 = pneg %p96
      %p103 = scmp.eq.s32.totalorder %s19, 1
      %p104 = por %p102, %p103
      %p105 = scmp.ne.s32.totalorder %s97, %s100
      %p106 = scmp.eq.s32.totalorder %s19, 0
      %p107 = por %p105, %p106
      %p108 = scmp.ne.s32.totalorder %s97, %s100
      %p109 = scmp.eq.s32.totalorder %s24, 1
      %p110 = por %p108, %p109
      %p111 = scmp.ne.s32.totalorder %s100, %s101
      %p112 = scmp.eq.s32.totalorder %s24, 0
      %p113 = por %p111, %p112
      %p114 = scmp.ne.s32.totalorder %s100, %s101
      %p115 = scmp.eq.s32.totalorder %s25, 1
      %p116 = por %p114, %p115
      %p118 = scmp.ne.s32.totalorder %s101, %s117
      %p119 = scmp.eq.s32.totalorder %s25, 0
      %p120 = por %p118, %p119
      %s121 = ssub.s32 %s19, %s26
      %p122 = scmp.eq.s32.totalorder %s121, 0
      %s124 = sadd.s32 %s123, 1
      %s125 = scalar_select %p122, %s123, %s124
      %p128 = pneg %p122
      %p129 = scmp.eq.s32.totalorder %s19, 1
      %p130 = por %p128, %p129
      %p131 = scmp.ne.s32.totalorder %s123, %s126
      %p132 = scmp.eq.s32.totalorder %s19, 0
      %p133 = por %p131, %p132
      %p134 = scmp.ne.s32.totalorder %s123, %s126
      %p135 = scmp.eq.s32.totalorder %s24, 1
      %p136 = por %p134, %p135
      %p137 = scmp.ne.s32.totalorder %s126, %s127
      %p138 = scmp.eq.s32.totalorder %s24, 0
      %p139 = por %p137, %p138
      %p140 = scmp.ne.s32.totalorder %s126, %s127
      %p141 = scmp.eq.s32.totalorder %s25, 1
      %p142 = por %p140, %p141
      %p144 = scmp.ne.s32.totalorder %s127, %s143
      %p145 = scmp.eq.s32.totalorder %s25, 0
      %p146 = por %p144, %p145
      %s147 = ssub.s32 %s19, %s26
      %p148 = scmp.eq.s32.totalorder %s147, 0
      %s150 = sadd.s32 %s149, 1
      %s151 = scalar_select %p148, %s149, %s150
      %p154 = pneg %p148
      %p155 = scmp.eq.s32.totalorder %s19, 1
      %p156 = por %p154, %p155
      %p157 = scmp.ne.s32.totalorder %s149, %s152
      %p158 = scmp.eq.s32.totalorder %s19, 0
      %p159 = por %p157, %p158
      %p160 = scmp.ne.s32.totalorder %s149, %s152
      %p161 = scmp.eq.s32.totalorder %s24, 1
      %p162 = por %p160, %p161
      %p163 = scmp.ne.s32.totalorder %s152, %s153
      %p164 = scmp.eq.s32.totalorder %s24, 0
      %p165 = por %p163, %p164
      %p166 = scmp.ne.s32.totalorder %s152, %s153
      %p167 = scmp.eq.s32.totalorder %s25, 1
      %p168 = por %p166, %p167
      %p170 = scmp.ne.s32.totalorder %s153, %s169
      %p171 = scmp.eq.s32.totalorder %s25, 0
      %p172 = por %p170, %p171
      %s173 = ssub.s32 %s19, %s26
      %p174 = scmp.eq.s32.totalorder %s173, 0
      %s176 = sadd.s32 %s175, 1
      %s177 = scalar_select %p174, %s175, %s176
      %p180 = pneg %p174
      %p181 = scmp.eq.s32.totalorder %s19, 1
      %p182 = por %p180, %p181
      %p183 = scmp.ne.s32.totalorder %s175, %s178
      %p184 = scmp.eq.s32.totalorder %s19, 0
      %p185 = por %p183, %p184
      %p186 = scmp.ne.s32.totalorder %s175, %s178
      %p187 = scmp.eq.s32.totalorder %s24, 1
      %p188 = por %p186, %p187
      %p189 = scmp.ne.s32.totalorder %s178, %s179
      %p190 = scmp.eq.s32.totalorder %s24, 0
      %p191 = por %p189, %p190
      %p192 = scmp.ne.s32.totalorder %s178, %s179
      %p193 = scmp.eq.s32.totalorder %s25, 1
      %p194 = por %p192, %p193
      %p196 = scmp.ne.s32.totalorder %s179, %s195
      %p197 = scmp.eq.s32.totalorder %s25, 0
      %p198 = por %p196, %p197
      %s199 = ssub.s32 %s19, %s26
      %p200 = scmp.eq.s32.totalorder %s199, 0
      %s202 = sadd.s32 %s201, 1
      %s203 = scalar_select %p200, %s201, %s202
      %p206 = pneg %p200
      %p207 = scmp.eq.s32.totalorder %s19, 1
      %p208 = por %p206, %p207
      %p209 = scmp.ne.s32.totalorder %s201, %s204
      %p210 = scmp.eq.s32.totalorder %s19, 0
      %p211 = por %p209, %p210
      %p212 = scmp.ne.s32.totalorder %s201, %s204
      %p213 = scmp.eq.s32.totalorder %s24, 1
      %p214 = por %p212, %p213
      %p215 = scmp.ne.s32.totalorder %s204, %s205
      %p216 = scmp.eq.s32.totalorder %s24, 0
      %p217 = por %p215, %p216
      %p218 = scmp.ne.s32.totalorder %s204, %s205
      %p219 = scmp.eq.s32.totalorder %s25, 1
      %p220 = por %p218, %p219
      %p222 = scmp.ne.s32.totalorder %s205, %s221
      %p223 = scmp.eq.s32.totalorder %s25, 0
      %p224 = por %p222, %p223
      %s226 = sadd.s32 %s225, 1
      %p229 = scmp.eq.s32.totalorder %s19, 1
      %p230 = scmp.ne.s32.totalorder %s225, %s227
      %p231 = scmp.eq.s32.totalorder %s19, 0
      %p232 = por %p230, %p231
      %p233 = scmp.ne.s32.totalorder %s225, %s227
      %p234 = scmp.eq.s32.totalorder %s24, 1
      %p235 = por %p233, %p234
      %p236 = scmp.ne.s32.totalorder %s227, %s228
      %p237 = scmp.eq.s32.totalorder %s24, 0
      %p238 = por %p236, %p237
      %p239 = scmp.ne.s32.totalorder %s227, %s228
      %p240 = scmp.eq.s32.totalorder %s25, 1
      %p241 = por %p239, %p240
      %p243 = scmp.ne.s32.totalorder %s228, %s242
      %p244 = scmp.eq.s32.totalorder %s25, 0
      %p245 = por %p243, %p244
      %s247 = sadd.s32 %s246, 1
      %p250 = scmp.eq.s32.totalorder %s19, 1
      %p251 = scmp.ne.s32.totalorder %s246, %s248
      %p252 = scmp.eq.s32.totalorder %s19, 0
      %p253 = por %p251, %p252
      %p254 = scmp.ne.s32.totalorder %s246, %s248
      %p255 = scmp.eq.s32.totalorder %s24, 1
      %p256 = por %p254, %p255
      %p257 = scmp.ne.s32.totalorder %s248, %s249
      %p258 = scmp.eq.s32.totalorder %s24, 0
      %p259 = por %p257, %p258
      %p260 = scmp.ne.s32.totalorder %s248, %s249
      %p261 = scmp.eq.s32.totalorder %s25, 1
      %p262 = por %p260, %p261
      %p264 = scmp.ne.s32.totalorder %s249, %s263
      %p265 = scmp.eq.s32.totalorder %s25, 0
      %p266 = por %p264, %p265
      %p267 = scmp.le.s32.totalorder 1, %s19
      %p268 = scmp.lt.s32.totalorder %s19, 3
      %p269 = pnand %p267, %p268
      %p270 = pneg %p269
      // Predicated region
      $region9: #{t5_encoder_forward.1} parent=5 // pred_check
        _
      $region10: #{t5_encoder_forward.1} parent=5 // pred_check_branch
        %272 = sbr.rel (%p269) target = $region12
      $region11: #{t5_encoder_forward.1} parent=5 // pred_region
        %s273 = ssub.s32 %s19, 1
        // Predicated region
        $region13: #{t5_encoder_forward.1} parent=11 // pred_check
          %p274 = pneg %p40
        $region14: #{t5_encoder_forward.1} parent=11 // pred_check_branch
          %276 = sbr.rel (%p274) target = $region16
        $region15: #{t5_encoder_forward.1} parent=11 // pred_region
          _
        $region16: #{t5_encoder_forward.1} parent=11 // pred_fallthru
          _
        // Predicated region
        $region17: #{t5_encoder_forward.1} parent=11 // pred_check
          %p277 = pneg %p61
        $region18: #{t5_encoder_forward.1} parent=11 // pred_check_branch
          %279 = sbr.rel (%p277) target = $region20
        $region19: #{t5_encoder_forward.1} parent=11 // pred_region
          _
        $region20: #{t5_encoder_forward.1} parent=11 // pred_fallthru
          _
        // Predicated region
        $region21: #{t5_encoder_forward.1} parent=11 // pred_check
          %p280 = pneg %p238
        $region22: #{t5_encoder_forward.1} parent=11 // pred_check_branch
          %282 = sbr.rel (%p280) target = $region24
        $region23: #{t5_encoder_forward.1} parent=11 // pred_region
          _
        $region24: #{t5_encoder_forward.1} parent=11 // pred_fallthru
          _
      $region12: #{t5_encoder_forward.1} parent=5 // pred_fallthru
        _
      %p283 = scmp.lt.s32.totalorder %s19, 2
      // Predicated region
      $region25: #{t5_encoder_forward.1} parent=5 // pred_check
        %p284 = pneg %p283
      $region26: #{t5_encoder_forward.1} parent=5 // pred_check_branch
        %286 = sbr.rel (%p284) target = $region28
      $region27: #{t5_encoder_forward.1} parent=5 // pred_region
        // Predicated region
        $region29: #{t5_encoder_forward.1} parent=27 // pred_check
          %p287 = pneg %p81
        $region30: #{t5_encoder_forward.1} parent=27 // pred_check_branch
          %289 = sbr.rel (%p287) target = $region32
        $region31: #{t5_encoder_forward.1} parent=27 // pred_region
          %p290 = scmp.lt.s32.totalorder %s19, 1
          %s291 = scalar_select %p290, %s19, 1
          %s292 = scalar_lea.vmem %s2, %s291
        $region32: #{t5_encoder_forward.1} parent=27 // pred_fallthru
          _
        // Predicated region
        $region33: #{t5_encoder_forward.1} parent=27 // pred_check
          %p293 = pneg %p107
        $region34: #{t5_encoder_forward.1} parent=27 // pred_check_branch
          %295 = sbr.rel (%p293) target = $region36
        $region35: #{t5_encoder_forward.1} parent=27 // pred_region
          %s296 = sand.u32 %s97, 1
          %s297 = scalar_lea.sflag [#allocation4], %s296
          %s298 = sand.u32 %s97, 1
          %s299 = smul.addr %s298, 192
          %s300 = scalar_lea.vmem [#allocation3], %s299
          %302 = vsyncadd %s297, 0
          %s303 = smul.addr %s19, 48
          %s304 = smul.addr %s303, 4
          %s305 = scalar_lea.hbm %s3, %s304
          %s306 = sshll.u32 %s305, 4
          %s307 = int_to_ptr.hbm [resolvable:$true] %s306
          %s308 = sshll.u32 %s300, 4
          %s309 = int_to_ptr.vmem [resolvable:$true] %s308
          %314 = dma.hbm_to_vmem [thread:$0]  %s307, 3072, %s309, %s297, 192, 192, 12
        $region36: #{t5_encoder_forward.1} parent=27 // pred_fallthru
          _
        // Predicated region
        $region37: #{t5_encoder_forward.1} parent=27 // pred_check
          %p315 = pneg %p133
        $region38: #{t5_encoder_forward.1} parent=27 // pred_check_branch
          %317 = sbr.rel (%p315) target = $region40
        $region39: #{t5_encoder_forward.1} parent=27 // pred_region
          %p318 = scmp.lt.s32.totalorder %s19, 1
          %s319 = scalar_select %p318, %s19, 1
          %s320 = smul.addr %s319, 16
          %s321 = smul.addr %s320, 4
          %s322 = scalar_lea.vmem %s4, %s321
        $region40: #{t5_encoder_forward.1} parent=27 // pred_fallthru
          _
        // Predicated region
        $region41: #{t5_encoder_forward.1} parent=27 // pred_check
          %p323 = pneg %p159
        $region42: #{t5_encoder_forward.1} parent=27 // pred_check_branch
          %325 = sbr.rel (%p323) target = $region44
        $region43: #{t5_encoder_forward.1} parent=27 // pred_region
          %p326 = scmp.lt.s32.totalorder %s19, 1
          %s327 = scalar_select %p326, %s19, 1
          %s328 = scalar_lea.vmem %s5, %s327
        $region44: #{t5_encoder_forward.1} parent=27 // pred_fallthru
          _
        // Predicated region
        $region45: #{t5_encoder_forward.1} parent=27 // pred_check
          %p329 = pneg %p185
        $region46: #{t5_encoder_forward.1} parent=27 // pred_check_branch
          %331 = sbr.rel (%p329) target = $region48
        $region47: #{t5_encoder_forward.1} parent=27 // pred_region
          %p332 = scmp.lt.s32.totalorder %s19, 1
          %s333 = scalar_select %p332, %s19, 1
          %s334 = smul.addr %s333, 64
          %s335 = smul.addr %s334, 4
          %s336 = scalar_lea.vmem %s6, %s335
        $region48: #{t5_encoder_forward.1} parent=27 // pred_fallthru
          _
        // Predicated region
        $region49: #{t5_encoder_forward.1} parent=27 // pred_check
          %p337 = pneg %p211
        $region50: #{t5_encoder_forward.1} parent=27 // pred_check_branch
          %339 = sbr.rel (%p337) target = $region52
        $region51: #{t5_encoder_forward.1} parent=27 // pred_region
          %p340 = scmp.lt.s32.totalorder %s19, 1
          %s341 = scalar_select %p340, %s19, 1
          %s342 = smul.addr %s341, 32
          %s343 = smul.addr %s342, 4
          %s344 = scalar_lea.vmem %s7, %s343
        $region52: #{t5_encoder_forward.1} parent=27 // pred_fallthru
          _
      $region28: #{t5_encoder_forward.1} parent=5 // pred_fallthru
        _
      %p345 = scmp.le.s32.totalorder 1, %s19
      %p346 = scmp.lt.s32.totalorder %s19, 3
      %p347 = pnand %p345, %p346
      %p348 = pneg %p347
      // Predicated region
      $region53: #{t5_encoder_forward.1} parent=5 // pred_check
        _
      $region54: #{t5_encoder_forward.1} parent=5 // pred_check_branch
        %350 = sbr.rel (%p347) target = $region56
      $region55: #{t5_encoder_forward.1} parent=5 // pred_region
        %s351 = ssub.s32 %s19, 1
        %s352 = sand.u32 %s100, 1
        %s353 = scalar_lea.sflag [#allocation4], %s352
        %s354 = sand.u32 %s100, 1
        %s355 = smul.addr %s354, 192
        %s356 = scalar_lea.vmem [#allocation3], %s355
        // Predicated region
        $region57: #{t5_encoder_forward.1} parent=55 // pred_check
          %p357 = pneg %p113
        $region58: #{t5_encoder_forward.1} parent=55 // pred_check_branch
          %359 = sbr.rel (%p357) target = $region60
        $region59: #{t5_encoder_forward.1} parent=55 // pred_region
          %361 = dma.done %s353, 3072
        $region60: #{t5_encoder_forward.1} parent=55 // pred_fallthru
          _
        %p362 = pneg %p40
        %p363 = pneg %p37
        %p364 = pneg %p61
        %p365 = pneg %p58
        %p366 = scmp.lt.s32.totalorder %s24, 1
        %s367 = scalar_select %p366, %s24, 1
        %s368 = scalar_lea.vmem %s2, %s367
        %p369 = pneg %p87
        %p370 = pneg %p84
        %s371 = sand.u32 %s100, 1
        %s372 = scalar_lea.sflag [#allocation4], %s371
        %s373 = sand.u32 %s100, 1
        %s374 = smul.addr %s373, 192
        %s375 = scalar_lea.vmem [#allocation3], %s374
        %p376 = pneg %p113
        %p377 = pneg %p110
        %p378 = scmp.lt.s32.totalorder %s24, 1
        %s379 = scalar_select %p378, %s24, 1
        %s380 = smul.addr %s379, 16
        %s381 = smul.addr %s380, 4
        %s382 = scalar_lea.vmem %s4, %s381
        %p383 = pneg %p139
        %p384 = pneg %p136
        %p385 = scmp.lt.s32.totalorder %s24, 1
        %s386 = scalar_select %p385, %s24, 1
        %s387 = scalar_lea.vmem %s5, %s386
        %p388 = pneg %p165
        %p389 = pneg %p162
        %p390 = scmp.lt.s32.totalorder %s24, 1
        %s391 = scalar_select %p390, %s24, 1
        %s392 = smul.addr %s391, 64
        %s393 = smul.addr %s392, 4
        %s394 = scalar_lea.vmem %s6, %s393
        %p395 = pneg %p191
        %p396 = pneg %p188
        %p397 = scmp.lt.s32.totalorder %s24, 1
        %s398 = scalar_select %p397, %s24, 1
        %s399 = smul.addr %s398, 32
        %s400 = smul.addr %s399, 4
        %s401 = scalar_lea.vmem %s7, %s400
        %p402 = pneg %p217
        %p403 = pneg %p214
        %p404 = pneg %p238
        %p405 = pneg %p235
        %p406 = pneg %p259
        %p407 = pneg %p256
        %p408 = scmp.lt.s32.totalorder %s24, 1
        %s409 = scalar_select %p408, %s24, 1
        %s410 = scalar_lea.vmem %s2, %s409
        %p411 = scmp.lt.s32.totalorder %s24, 1
        %s412 = scalar_select %p411, %s24, 1
        %s413 = smul.addr %s412, 16
        %s414 = smul.addr %s413, 4
        %s415 = scalar_lea.vmem %s4, %s414
        %p416 = scmp.lt.s32.totalorder %s24, 1
        %s417 = scalar_select %p416, %s24, 1
        %s418 = scalar_lea.vmem %s5, %s417
        %p419 = scmp.lt.s32.totalorder %s24, 1
        %s420 = scalar_select %p419, %s24, 1
        %s421 = smul.addr %s420, 64
        %s422 = smul.addr %s421, 4
        %s423 = scalar_lea.vmem %s6, %s422
        %p424 = scmp.lt.s32.totalorder %s24, 1
        %s425 = scalar_select %p424, %s24, 1
        %s426 = smul.addr %s425, 32
        %s427 = smul.addr %s426, 4
        %s428 = scalar_lea.vmem %s7, %s427
        %p430 = scmp.eq.s32.totalorder %s24, 0
        // Predicated region
        $region61: #{t5_encoder_forward.1} parent=55 // pred_check
          %p431 = pneg %p430
        $region62: #{t5_encoder_forward.1} parent=55 // pred_check_branch
          %433 = sbr.rel (%p431) target = $region64
        $region63: #{t5_encoder_forward.1} parent=55 // pred_region
          %v434 = vld [vmem:[%s0] sm:$0xff]
          %v435 = vld [vmem:[%s0 + $0x8] sm:$0xff]
          %436 = vst [vmem:[#allocation2] sm:$0xff] %v434
          %437 = vst [vmem:[#allocation2 + $0x8] sm:$0xff] %v435
        $region64: #{t5_encoder_forward.1} parent=55 // pred_fallthru
          _
        %v438 = vld [vmem:[#allocation2] sm:$0xff]
        %v439 = vld [vmem:[#allocation2 + $0x8] sm:$0xff]
        %v440 = vld [vmem:[%s410] sm:$0x1]
        %v441 = vmul.f32 %v438, %v438
        %v442 = vmul.f32 %v439, %v439
        %443 = vadd.xlane.f32.xlu0 %v441
        %v444 = vpop.xlane.xlu0 %443
        %445 = vadd.xlane.f32.xlu0 %v442
        %v446 = vpop.xlane.xlu0 %445
        %v447 = vrcp.pop 128.0
        %v448 = vmul.f32 128.0, %v447
        %v449 = vsub.f32 1.0, %v448
        %v450 = vmul.f32 %v447, %v449
        %v451 = vadd.f32 %v447, %v450
        %vm452 = vweird.f32 %v447
        %v453 = vsel %vm452, %v447, %v451
        %v454 = vmul.f32 %v444, %v453
        %v455 = vmul.f32 %v446, %v453
        %v456 = vadd.f32 %v454, 1e-06
        %v457 = vadd.f32 %v455, 1e-06
        %v458 = vrsqrt.pop %v456
        %v459 = vmul.f32 %v458, %v456
        %v460 = vmul.f32 %v459, %v458
        %v461 = vmul.f32 0.5, %v460
        %v462 = vsub.f32 1.5, %v461
        %v463 = vmul.f32 %v458, %v462
        %vm464 = vweird.f32 %v456
        %vm465 = vweird.f32 %v458
        %vm466 = vmor %vm464, %vm465
        %v467 = vsel %vm466, %v458, %v463
        %v468 = vrsqrt.pop %v457
        %v469 = vmul.f32 %v468, %v457
        %v470 = vmul.f32 %v469, %v468
        %v471 = vmul.f32 0.5, %v470
        %v472 = vsub.f32 1.5, %v471
        %v473 = vmul.f32 %v468, %v472
        %vm474 = vweird.f32 %v457
        %vm475 = vweird.f32 %v468
        %vm476 = vmor %vm474, %vm475
        %v477 = vsel %vm476, %v468, %v473
        %v478 = vmul.f32 %v438, %v467
        %v479 = vmul.f32 %v439, %v477
        %v481 = vperm.slane %v440, 0
        %v483 = vmul.f32 %v478, %v481
        %v484 = vmul.f32 %v479, %v481
        %v485 = vpack.c.bf16 %v484, %v483
        %v486 = vld [vmem:[%s356] sm:$0xff]
        %v487 = vld [vmem:[%s356 + $0x8] sm:$0xf]
        %v488 = vld [vmem:[%s356 + $0xc] sm:$0xff]
        %v489 = vld [vmem:[%s356 + $0x14] sm:$0xf]
        %v490 = vld [vmem:[%s356 + $0x18] sm:$0xff]
        %v491 = vld [vmem:[%s356 + $0x20] sm:$0xf]
        %v492 = vld [vmem:[%s356 + $0x24] sm:$0xff]
        %v493 = vld [vmem:[%s356 + $0x2c] sm:$0xf]
        %v494 = vld [vmem:[%s356 + $0x30] sm:$0xff]
        %v495 = vld [vmem:[%s356 + $0x38] sm:$0xf]
        %v496 = vld [vmem:[%s356 + $0x3c] sm:$0xff]
        %v497 = vld [vmem:[%s356 + $0x44] sm:$0xf]
        %v498 = vld [vmem:[%s356 + $0x48] sm:$0xff]
        %v499 = vld [vmem:[%s356 + $0x50] sm:$0xf]
        %v500 = vld [vmem:[%s356 + $0x54] sm:$0xff]
        %v501 = vld [vmem:[%s356 + $0x5c] sm:$0xf]
        %v502 = vld [vmem:[%s356 + $0x60] sm:$0xff]
        %v503 = vld [vmem:[%s356 + $0x68] sm:$0xf]
        %v504 = vld [vmem:[%s356 + $0x6c] sm:$0xff]
        %v505 = vld [vmem:[%s356 + $0x74] sm:$0xf]
        %v506 = vld [vmem:[%s356 + $0x78] sm:$0xff]
        %v507 = vld [vmem:[%s356 + $0x80] sm:$0xf]
        %v508 = vld [vmem:[%s356 + $0x84] sm:$0xff]
        %v509 = vld [vmem:[%s356 + $0x8c] sm:$0xf]
        %v510 = vld [vmem:[%s356 + $0x90] sm:$0xff]
        %v511 = vld [vmem:[%s356 + $0x98] sm:$0xf]
        %v512 = vld [vmem:[%s356 + $0x9c] sm:$0xff]
        %v513 = vld [vmem:[%s356 + $0xa4] sm:$0xf]
        %v514 = vld [vmem:[%s356 + $0xa8] sm:$0xff]
        %v515 = vld [vmem:[%s356 + $0xb0] sm:$0xf]
        %v516 = vld [vmem:[%s356 + $0xb4] sm:$0xff]
        %v517 = vld [vmem:[%s356 + $0xbc] sm:$0xf]
        %v550 = vunpack.c.l.b16 %v486
        %v551 = vunpack.c.h.b16 %v486
        %v552 = vunpack.c.l.b16 %v487
        %v553 = vunpack.c.l.b16 %v488
        %v554 = vunpack.c.h.b16 %v488
        %v555 = vunpack.c.l.b16 %v489
        %v556 = vunpack.c.l.b16 %v490
        %v557 = vunpack.c.h.b16 %v490
        %v558 = vunpack.c.l.b16 %v491
        %v559 = vunpack.c.l.b16 %v492
        %v560 = vunpack.c.h.b16 %v492
        %v561 = vunpack.c.l.b16 %v493
        %v562 = vunpack.c.l.b16 %v494
        %v563 = vunpack.c.h.b16 %v494
        %v564 = vunpack.c.l.b16 %v495
        %v565 = vunpack.c.l.b16 %v496
        %v566 = vunpack.c.h.b16 %v496
        %v567 = vunpack.c.l.b16 %v497
        %v568 = vunpack.c.l.b16 %v498
        %v569 = vunpack.c.h.b16 %v498
        %v570 = vunpack.c.l.b16 %v499
        %v571 = vunpack.c.l.b16 %v500
        %v572 = vunpack.c.h.b16 %v500
        %v573 = vunpack.c.l.b16 %v501
        %v574 = vunpack.c.l.b16 %v502
        %v575 = vunpack.c.h.b16 %v502
        %v576 = vunpack.c.l.b16 %v503
        %v577 = vunpack.c.l.b16 %v504
        %v578 = vunpack.c.h.b16 %v504
        %v579 = vunpack.c.l.b16 %v505
        %v580 = vunpack.c.l.b16 %v506
        %v581 = vunpack.c.h.b16 %v506
        %v582 = vunpack.c.l.b16 %v507
        %v583 = vunpack.c.l.b16 %v508
        %v584 = vunpack.c.h.b16 %v508
        %v585 = vunpack.c.l.b16 %v509
        %v586 = vunpack.c.l.b16 %v510
        %v587 = vunpack.c.h.b16 %v510
        %v588 = vunpack.c.l.b16 %v511
        %v589 = vunpack.c.l.b16 %v512
        %v590 = vunpack.c.h.b16 %v512
        %v591 = vunpack.c.l.b16 %v513
        %v592 = vunpack.c.l.b16 %v514
        %v593 = vunpack.c.h.b16 %v514
        %v594 = vunpack.c.l.b16 %v515
        %v595 = vunpack.c.l.b16 %v516
        %v596 = vunpack.c.h.b16 %v516
        %v597 = vunpack.c.l.b16 %v517
        %v598 = vpack.c.b16 %v553, %v550
        %v599 = vpack.c.b16 %v554, %v551
        %v600 = vpack.c.b16 %v555, %v552
        %v601 = vpack.c.b16 %v559, %v556
        %v602 = vpack.c.b16 %v560, %v557
        %v603 = vpack.c.b16 %v561, %v558
        %v604 = vpack.c.b16 %v565, %v562
        %v605 = vpack.c.b16 %v566, %v563
        %v606 = vpack.c.b16 %v567, %v564
        %v607 = vpack.c.b16 %v571, %v568
        %v608 = vpack.c.b16 %v572, %v569
        %v609 = vpack.c.b16 %v573, %v570
        %v610 = vpack.c.b16 %v577, %v574
        %v611 = vpack.c.b16 %v578, %v575
        %v612 = vpack.c.b16 %v579, %v576
        %v613 = vpack.c.b16 %v583, %v580
        %v614 = vpack.c.b16 %v584, %v581
        %v615 = vpack.c.b16 %v585, %v582
        %v616 = vpack.c.b16 %v589, %v586
        %v617 = vpack.c.b16 %v590, %v587
        %v618 = vpack.c.b16 %v591, %v588
        %v619 = vpack.c.b16 %v595, %v592
        %v620 = vpack.c.b16 %v596, %v593
        %v621 = vpack.c.b16 %v597, %v594
        %646 = vmatpush.bf16.msra.mxu0 %v619
        %647 = vmatpush.bf16.msra.mxu0 %v616
        %648 = vmatpush.bf16.msra.mxu0 %v613
        %649 = vmatpush.bf16.msra.mxu0 %v610
        %650 = vmatpush.bf16.msra.mxu0 %v607
        %651 = vmatpush.bf16.msra.mxu0 %v604
        %652 = vmatpush.bf16.msra.mxu0 %v601
        %653 = vmatpush.bf16.msra.mxu0 %v598
        %654 = vmatmul.bf16.gmra.mxu0 %v485
        %v655 = vpop.f32.mrf.mxu0
        %v656 = vadd.f32 0.0, %v655
        %v657 = vpop.f32.mrf.mxu0
        %v658 = vadd.f32 0.0, %v657
        %659 = vdwg.mxu0
        %660 = vmatpush.bf16.msra.mxu0 %v620
        %661 = vmatpush.bf16.msra.mxu0 %v617
        %662 = vmatpush.bf16.msra.mxu0 %v614
        %663 = vmatpush.bf16.msra.mxu0 %v611
        %664 = vmatpush.bf16.msra.mxu0 %v608
        %665 = vmatpush.bf16.msra.mxu0 %v605
        %666 = vmatpush.bf16.msra.mxu0 %v602
        %667 = vmatpush.bf16.msra.mxu0 %v599
        %668 = vmatmul.bf16.gmra.mxu0 %v485
        %v669 = vpop.f32.mrf.mxu0
        %v670 = vadd.f32 0.0, %v669
        %v671 = vpop.f32.mrf.mxu0
        %v672 = vadd.f32 0.0, %v671
        %673 = vdwg.mxu0
        %674 = vmatpush.bf16.msra.mxu0 %v621
        %675 = vmatpush.bf16.msra.mxu0 %v618
        %676 = vmatpush.bf16.msra.mxu0 %v615
        %677 = vmatpush.bf16.msra.mxu0 %v612
        %678 = vmatpush.bf16.msra.mxu0 %v609
        %679 = vmatpush.bf16.msra.mxu0 %v606
        %680 = vmatpush.bf16.msra.mxu0 %v603
        %681 = vmatpush.bf16.msra.mxu0 %v600
        %682 = vmatmul.bf16.gmra.mxu0 %v485
        %v683 = vpop.f32.mrf.mxu0
        %v684 = vadd.f32 0.0, %v683
        %v685 = vpop.f32.mrf.mxu0
        %v686 = vadd.f32 0.0, %v685
        %687 = vdwg.mxu0
        %v688 = vpack.c.bf16 %v656, %v656
        %v689 = vpack.c.bf16 %v670, %v670
        %v690 = vpack.c.bf16 %v684, %v684
        %v691 = vld [vmem:[%s1] sm:$0xff]
        %vm692 = vcmask 261120
        %v694 = vsel %vm692, %v688, 0
        %v697 = vsel %vm692, %v689, 0
        %699 = vmatpush.bf16.xpose.msra.mxu0 0
        %700 = vmatpush.bf16.xpose.msra.mxu0 0
        %701 = vmatpush.bf16.xpose.msra.mxu0 0
        %702 = vmatpush.bf16.xpose.msra.mxu0 0
        %703 = vmatpush.bf16.xpose.msra.mxu0 0
        %704 = vmatpush.bf16.xpose.msra.mxu0 0
        %705 = vmatpush.bf16.xpose.msra.mxu0 0
        %706 = vmatpush.bf16.xpose.msra.mxu0 %v697
        %707 = vmatmul.bf16.gmra.mxu0 %v694
        %v708 = vpop.f32.mrf.mxu0
        %v709 = vadd.f32 %v691, %v708
        %v710 = vpop.f32.mrf.mxu0
        %711 = vdwg.mxu0
        %vm712 = vcmask 64512
        %v713 = vsel %vm712, %v709, -inf
        %714 = vmax.xlane.f32.xlu0 %v713
        %v715 = vpop.xlane.xlu0 %714
        %v716 = vsub.f32 %v709, %v715
        %v717 = vmul.f32 %v716, 1.442695
        %v718 = vpow.pop %v717
        %v719 = vsel %vm712, %v718, 0.0
        %720 = vadd.xlane.f32.xlu0 %v719
        %v721 = vpop.xlane.xlu0 %720
        %v722 = vrcp.pop %v721
        %v723 = vmul.f32 %v718, %v722
        %v724 = vpack.c.bf16 %v723, %v723
        %v726 = vsel %vm712, %v724, 0
        %vm728 = vcmask 1043456
        %v730 = vsel %vm728, %v690, 0
        %732 = vmatpush.bf16.msra.mxu0 0
        %733 = vmatpush.bf16.msra.mxu0 0
        %734 = vmatpush.bf16.msra.mxu0 0
        %735 = vmatpush.bf16.msra.mxu0 0
        %736 = vmatpush.bf16.msra.mxu0 0
        %737 = vmatpush.bf16.msra.mxu0 0
        %738 = vmatpush.bf16.msra.mxu0 0
        %739 = vmatpush.bf16.msra.mxu0 %v730
        %740 = vmatmul.bf16.gmra.mxu0 %v726
        %v741 = vpop.f32.mrf.mxu0
        %v742 = vadd.f32 0.0, %v741
        %v743 = vpop.f32.mrf.mxu0
        %744 = vdwg.mxu0
        %s745 = scalar_lea.vmem %s1, 8
        %v746 = vld [vmem:[%s745] sm:$0xff]
        %748 = vrot.lane.b32.xlu0 %v688, 96
        %v749 = vpop.permute.xlu0 %748
        %751 = vrot.lane.b32.xlu0 %v689, 96
        %v752 = vpop.permute.xlu0 %751
        %v754 = vsel %vm692, %v749, 0
        %v757 = vsel %vm692, %v752, 0
        %759 = vmatpush.bf16.xpose.msra.mxu0 0
        %760 = vmatpush.bf16.xpose.msra.mxu0 0
        %761 = vmatpush.bf16.xpose.msra.mxu0 0
        %762 = vmatpush.bf16.xpose.msra.mxu0 0
        %763 = vmatpush.bf16.xpose.msra.mxu0 0
        %764 = vmatpush.bf16.xpose.msra.mxu0 0
        %765 = vmatpush.bf16.xpose.msra.mxu0 0
        %766 = vmatpush.bf16.xpose.msra.mxu0 %v757
        %767 = vmatmul.bf16.gmra.mxu0 %v754
        %v768 = vpop.f32.mrf.mxu0
        %v769 = vadd.f32 %v746, %v768
        %v770 = vpop.f32.mrf.mxu0
        %771 = vdwg.mxu0
        %v772 = vsel %vm712, %v769, -inf
        %773 = vmax.xlane.f32.xlu0 %v772
        %v774 = vpop.xlane.xlu0 %773
        %v775 = vsub.f32 %v769, %v774
        %v776 = vmul.f32 %v775, 1.442695
        %v777 = vpow.pop %v776
        %v778 = vsel %vm712, %v777, 0.0
        %779 = vadd.xlane.f32.xlu0 %v778
        %v780 = vpop.xlane.xlu0 %779
        %v781 = vrcp.pop %v780
        %v782 = vmul.f32 %v777, %v781
        %v783 = vpack.c.bf16 %v782, %v782
        %785 = vrot.lane.b32.xlu0 %v690, 96
        %v786 = vpop.permute.xlu0 %785
        %v788 = vsel %vm712, %v783, 0
        %v791 = vsel %vm728, %v786, 0
        %793 = vmatpush.bf16.msra.mxu0 0
        %794 = vmatpush.bf16.msra.mxu0 0
        %795 = vmatpush.bf16.msra.mxu0 0
        %796 = vmatpush.bf16.msra.mxu0 0
        %797 = vmatpush.bf16.msra.mxu0 0
        %798 = vmatpush.bf16.msra.mxu0 0
        %799 = vmatpush.bf16.msra.mxu0 0
        %800 = vmatpush.bf16.msra.mxu0 %v791
        %801 = vmatmul.bf16.gmra.mxu0 %v788
        %v802 = vpop.f32.mrf.mxu0
        %v803 = vadd.f32 0.0, %v802
        %v804 = vpop.f32.mrf.mxu0
        %805 = vdwg.mxu0
        %s806 = scalar_lea.vmem %s1, 16
        %v807 = vld [vmem:[%s806] sm:$0xff]
        %808 = vrot.lane.b32.xlu0 %v688, 64
        %v809 = vpop.permute.xlu0 %808
        %810 = vrot.lane.b32.xlu0 %v689, 64
        %v811 = vpop.permute.xlu0 %810
        %v813 = vsel %vm692, %v809, 0
        %v816 = vsel %vm692, %v811, 0
        %818 = vmatpush.bf16.xpose.msra.mxu0 0
        %819 = vmatpush.bf16.xpose.msra.mxu0 0
        %820 = vmatpush.bf16.xpose.msra.mxu0 0
        %821 = vmatpush.bf16.xpose.msra.mxu0 0
        %822 = vmatpush.bf16.xpose.msra.mxu0 0
        %823 = vmatpush.bf16.xpose.msra.mxu0 0
        %824 = vmatpush.bf16.xpose.msra.mxu0 0
        %825 = vmatpush.bf16.xpose.msra.mxu0 %v816
        %826 = vmatmul.bf16.gmra.mxu0 %v813
        %v827 = vpop.f32.mrf.mxu0
        %v828 = vadd.f32 %v807, %v827
        %v829 = vpop.f32.mrf.mxu0
        %830 = vdwg.mxu0
        %v831 = vsel %vm712, %v828, -inf
        %832 = vmax.xlane.f32.xlu0 %v831
        %v833 = vpop.xlane.xlu0 %832
        %v834 = vsub.f32 %v828, %v833
        %v835 = vmul.f32 %v834, 1.442695
        %v836 = vpow.pop %v835
        %v837 = vsel %vm712, %v836, 0.0
        %838 = vadd.xlane.f32.xlu0 %v837
        %v839 = vpop.xlane.xlu0 %838
        %v840 = vrcp.pop %v839
        %v841 = vmul.f32 %v836, %v840
        %v842 = vpack.c.bf16 %v841, %v841
        %843 = vrot.lane.b32.xlu0 %v690, 64
        %v844 = vpop.permute.xlu0 %843
        %v846 = vsel %vm712, %v842, 0
        %v849 = vsel %vm728, %v844, 0
        %851 = vmatpush.bf16.msra.mxu0 0
        %852 = vmatpush.bf16.msra.mxu0 0
        %853 = vmatpush.bf16.msra.mxu0 0
        %854 = vmatpush.bf16.msra.mxu0 0
        %855 = vmatpush.bf16.msra.mxu0 0
        %856 = vmatpush.bf16.msra.mxu0 0
        %857 = vmatpush.bf16.msra.mxu0 0
        %858 = vmatpush.bf16.msra.mxu0 %v849
        %859 = vmatmul.bf16.gmra.mxu0 %v846
        %v860 = vpop.f32.mrf.mxu0
        %v861 = vadd.f32 0.0, %v860
        %v862 = vpop.f32.mrf.mxu0
        %863 = vdwg.mxu0
        %s864 = scalar_lea.vmem %s1, 24
        %v865 = vld [vmem:[%s864] sm:$0xff]
        %866 = vrot.lane.b32.xlu0 %v688, 32
        %v867 = vpop.permute.xlu0 %866
        %868 = vrot.lane.b32.xlu0 %v689, 32
        %v869 = vpop.permute.xlu0 %868
        %v871 = vsel %vm692, %v867, 0
        %v874 = vsel %vm692, %v869, 0
        %876 = vmatpush.bf16.xpose.msra.mxu0 0
        %877 = vmatpush.bf16.xpose.msra.mxu0 0
        %878 = vmatpush.bf16.xpose.msra.mxu0 0
        %879 = vmatpush.bf16.xpose.msra.mxu0 0
        %880 = vmatpush.bf16.xpose.msra.mxu0 0
        %881 = vmatpush.bf16.xpose.msra.mxu0 0
        %882 = vmatpush.bf16.xpose.msra.mxu0 0
        %883 = vmatpush.bf16.xpose.msra.mxu0 %v874
        %884 = vmatmul.bf16.gmra.mxu0 %v871
        %v885 = vpop.f32.mrf.mxu0
        %v886 = vadd.f32 %v865, %v885
        %v887 = vpop.f32.mrf.mxu0
        %888 = vdwg.mxu0
        %v889 = vsel %vm712, %v886, -inf
        %890 = vmax.xlane.f32.xlu0 %v889
        %v891 = vpop.xlane.xlu0 %890
        %v892 = vsub.f32 %v886, %v891
        %v893 = vmul.f32 %v892, 1.442695
        %v894 = vpow.pop %v893
        %v895 = vsel %vm712, %v894, 0.0
        %896 = vadd.xlane.f32.xlu0 %v895
        %v897 = vpop.xlane.xlu0 %896
        %v898 = vrcp.pop %v897
        %v899 = vmul.f32 %v894, %v898
        %v900 = vpack.c.bf16 %v899, %v899
        %901 = vrot.lane.b32.xlu0 %v690, 32
        %v902 = vpop.permute.xlu0 %901
        %v904 = vsel %vm712, %v900, 0
        %v907 = vsel %vm728, %v902, 0
        %909 = vmatpush.bf16.msra.mxu0 0
        %910 = vmatpush.bf16.msra.mxu0 0
        %911 = vmatpush.bf16.msra.mxu0 0
        %912 = vmatpush.bf16.msra.mxu0 0
        %913 = vmatpush.bf16.msra.mxu0 0
        %914 = vmatpush.bf16.msra.mxu0 0
        %915 = vmatpush.bf16.msra.mxu0 0
        %916 = vmatpush.bf16.msra.mxu0 %v907
        %917 = vmatmul.bf16.gmra.mxu0 %v904
        %v918 = vpop.f32.mrf.mxu0
        %v919 = vadd.f32 0.0, %v918
        %v920 = vpop.f32.mrf.mxu0
        %921 = vdwg.mxu0
        %923 = vrot.lane.b32.xlu0 %v803, 32
        %v924 = vpop.permute.xlu0 %923
        %927 = vrot.lane.b32.xlu0 %v861, 64
        %v928 = vpop.permute.xlu0 %927
        %931 = vrot.lane.b32.xlu0 %v919, 96
        %v932 = vpop.permute.xlu0 %931
        %v934 = vsel %vm692, %v742, %v924
        %vm935 = vcmask 523264
        %v936 = vsel %vm935, %v934, %v928
        %vm937 = vcmask 785408
        %v938 = vsel %vm937, %v936, %v932
        %v939 = vpack.c.bf16 %v658, %v658
        %v940 = vpack.c.bf16 %v672, %v672
        %v941 = vpack.c.bf16 %v686, %v686
        %v943 = vsel %vm692, %v939, 0
        %v946 = vsel %vm692, %v940, 0
        %948 = vmatpush.bf16.xpose.msra.mxu0 0
        %949 = vmatpush.bf16.xpose.msra.mxu0 0
        %950 = vmatpush.bf16.xpose.msra.mxu0 0
        %951 = vmatpush.bf16.xpose.msra.mxu0 0
        %952 = vmatpush.bf16.xpose.msra.mxu0 0
        %953 = vmatpush.bf16.xpose.msra.mxu0 0
        %954 = vmatpush.bf16.xpose.msra.mxu0 0
        %955 = vmatpush.bf16.xpose.msra.mxu0 %v946
        %956 = vmatmul.bf16.gmra.mxu0 %v943
        %v957 = vpop.f32.mrf.mxu0
        %v958 = vadd.f32 %v691, %v957
        %v959 = vpop.f32.mrf.mxu0
        %960 = vdwg.mxu0
        %v961 = vsel %vm712, %v958, -inf
        %962 = vmax.xlane.f32.xlu0 %v961
        %v963 = vpop.xlane.xlu0 %962
        %v964 = vsub.f32 %v958, %v963
        %v965 = vmul.f32 %v964, 1.442695
        %v966 = vpow.pop %v965
        %v967 = vsel %vm712, %v966, 0.0
        %968 = vadd.xlane.f32.xlu0 %v967
        %v969 = vpop.xlane.xlu0 %968
        %v970 = vrcp.pop %v969
        %v971 = vmul.f32 %v966, %v970
        %v972 = vpack.c.bf16 %v971, %v971
        %v974 = vsel %vm712, %v972, 0
        %v977 = vsel %vm728, %v941, 0
        %979 = vmatpush.bf16.msra.mxu0 0
        %980 = vmatpush.bf16.msra.mxu0 0
        %981 = vmatpush.bf16.msra.mxu0 0
        %982 = vmatpush.bf16.msra.mxu0 0
        %983 = vmatpush.bf16.msra.mxu0 0
        %984 = vmatpush.bf16.msra.mxu0 0
        %985 = vmatpush.bf16.msra.mxu0 0
        %986 = vmatpush.bf16.msra.mxu0 %v977
        %987 = vmatmul.bf16.gmra.mxu0 %v974
        %v988 = vpop.f32.mrf.mxu0
        %v989 = vadd.f32 0.0, %v988
        %v990 = vpop.f32.mrf.mxu0
        %991 = vdwg.mxu0
        %993 = vrot.lane.b32.xlu0 %v939, 96
        %v994 = vpop.permute.xlu0 %993
        %996 = vrot.lane.b32.xlu0 %v940, 96
        %v997 = vpop.permute.xlu0 %996
        %v999 = vsel %vm692, %v994, 0
        %v1002 = vsel %vm692, %v997, 0
        %1004 = vmatpush.bf16.xpose.msra.mxu0 0
        %1005 = vmatpush.bf16.xpose.msra.mxu0 0
        %1006 = vmatpush.bf16.xpose.msra.mxu0 0
        %1007 = vmatpush.bf16.xpose.msra.mxu0 0
        %1008 = vmatpush.bf16.xpose.msra.mxu0 0
        %1009 = vmatpush.bf16.xpose.msra.mxu0 0
        %1010 = vmatpush.bf16.xpose.msra.mxu0 0
        %1011 = vmatpush.bf16.xpose.msra.mxu0 %v1002
        %1012 = vmatmul.bf16.gmra.mxu0 %v999
        %v1013 = vpop.f32.mrf.mxu0
        %v1014 = vadd.f32 %v746, %v1013
        %v1015 = vpop.f32.mrf.mxu0
        %1016 = vdwg.mxu0
        %v1017 = vsel %vm712, %v1014, -inf
        %1018 = vmax.xlane.f32.xlu0 %v1017
        %v1019 = vpop.xlane.xlu0 %1018
        %v1020 = vsub.f32 %v1014, %v1019
        %v1021 = vmul.f32 %v1020, 1.442695
        %v1022 = vpow.pop %v1021
        %v1023 = vsel %vm712, %v1022, 0.0
        %1024 = vadd.xlane.f32.xlu0 %v1023
        %v1025 = vpop.xlane.xlu0 %1024
        %v1026 = vrcp.pop %v1025
        %v1027 = vmul.f32 %v1022, %v1026
        %v1028 = vpack.c.bf16 %v1027, %v1027
        %1030 = vrot.lane.b32.xlu0 %v941, 96
        %v1031 = vpop.permute.xlu0 %1030
        %v1033 = vsel %vm712, %v1028, 0
        %v1036 = vsel %vm728, %v1031, 0
        %1038 = vmatpush.bf16.msra.mxu0 0
        %1039 = vmatpush.bf16.msra.mxu0 0
        %1040 = vmatpush.bf16.msra.mxu0 0
        %1041 = vmatpush.bf16.msra.mxu0 0
        %1042 = vmatpush.bf16.msra.mxu0 0
        %1043 = vmatpush.bf16.msra.mxu0 0
        %1044 = vmatpush.bf16.msra.mxu0 0
        %1045 = vmatpush.bf16.msra.mxu0 %v1036
        %1046 = vmatmul.bf16.gmra.mxu0 %v1033
        %v1047 = vpop.f32.mrf.mxu0
        %v1048 = vadd.f32 0.0, %v1047
        %v1049 = vpop.f32.mrf.mxu0
        %1050 = vdwg.mxu0
        %1051 = vrot.lane.b32.xlu0 %v939, 64
        %v1052 = vpop.permute.xlu0 %1051
        %1053 = vrot.lane.b32.xlu0 %v940, 64
        %v1054 = vpop.permute.xlu0 %1053
        %v1056 = vsel %vm692, %v1052, 0
        %v1059 = vsel %vm692, %v1054, 0
        %1061 = vmatpush.bf16.xpose.msra.mxu0 0
        %1062 = vmatpush.bf16.xpose.msra.mxu0 0
        %1063 = vmatpush.bf16.xpose.msra.mxu0 0
        %1064 = vmatpush.bf16.xpose.msra.mxu0 0
        %1065 = vmatpush.bf16.xpose.msra.mxu0 0
        %1066 = vmatpush.bf16.xpose.msra.mxu0 0
        %1067 = vmatpush.bf16.xpose.msra.mxu0 0
        %1068 = vmatpush.bf16.xpose.msra.mxu0 %v1059
        %1069 = vmatmul.bf16.gmra.mxu0 %v1056
        %v1070 = vpop.f32.mrf.mxu0
        %v1071 = vadd.f32 %v807, %v1070
        %v1072 = vpop.f32.mrf.mxu0
        %1073 = vdwg.mxu0
        %v1074 = vsel %vm712, %v1071, -inf
        %1075 = vmax.xlane.f32.xlu0 %v1074
        %v1076 = vpop.xlane.xlu0 %1075
        %v1077 = vsub.f32 %v1071, %v1076
        %v1078 = vmul.f32 %v1077, 1.442695
        %v1079 = vpow.pop %v1078
        %v1080 = vsel %vm712, %v1079, 0.0
        %1081 = vadd.xlane.f32.xlu0 %v1080
        %v1082 = vpop.xlane.xlu0 %1081
        %v1083 = vrcp.pop %v1082
        %v1084 = vmul.f32 %v1079, %v1083
        %v1085 = vpack.c.bf16 %v1084, %v1084
        %1086 = vrot.lane.b32.xlu0 %v941, 64
        %v1087 = vpop.permute.xlu0 %1086
        %v1089 = vsel %vm712, %v1085, 0
        %v1092 = vsel %vm728, %v1087, 0
        %1094 = vmatpush.bf16.msra.mxu0 0
        %1095 = vmatpush.bf16.msra.mxu0 0
        %1096 = vmatpush.bf16.msra.mxu0 0
        %1097 = vmatpush.bf16.msra.mxu0 0
        %1098 = vmatpush.bf16.msra.mxu0 0
        %1099 = vmatpush.bf16.msra.mxu0 0
        %1100 = vmatpush.bf16.msra.mxu0 0
        %1101 = vmatpush.bf16.msra.mxu0 %v1092
        %1102 = vmatmul.bf16.gmra.mxu0 %v1089
        %v1103 = vpop.f32.mrf.mxu0
        %v1104 = vadd.f32 0.0, %v1103
        %v1105 = vpop.f32.mrf.mxu0
        %1106 = vdwg.mxu0
        %1107 = vrot.lane.b32.xlu0 %v939, 32
        %v1108 = vpop.permute.xlu0 %1107
        %1109 = vrot.lane.b32.xlu0 %v940, 32
        %v1110 = vpop.permute.xlu0 %1109
        %v1112 = vsel %vm692, %v1108, 0
        %v1115 = vsel %vm692, %v1110, 0
        %1117 = vmatpush.bf16.xpose.msra.mxu0 0
        %1118 = vmatpush.bf16.xpose.msra.mxu0 0
        %1119 = vmatpush.bf16.xpose.msra.mxu0 0
        %1120 = vmatpush.bf16.xpose.msra.mxu0 0
        %1121 = vmatpush.bf16.xpose.msra.mxu0 0
        %1122 = vmatpush.bf16.xpose.msra.mxu0 0
        %1123 = vmatpush.bf16.xpose.msra.mxu0 0
        %1124 = vmatpush.bf16.xpose.msra.mxu0 %v1115
        %1125 = vmatmul.bf16.gmra.mxu0 %v1112
        %v1126 = vpop.f32.mrf.mxu0
        %v1127 = vadd.f32 %v865, %v1126
        %v1128 = vpop.f32.mrf.mxu0
        %1129 = vdwg.mxu0
        %v1130 = vsel %vm712, %v1127, -inf
        %1131 = vmax.xlane.f32.xlu0 %v1130
        %v1132 = vpop.xlane.xlu0 %1131
        %v1133 = vsub.f32 %v1127, %v1132
        %v1134 = vmul.f32 %v1133, 1.442695
        %v1135 = vpow.pop %v1134
        %v1136 = vsel %vm712, %v1135, 0.0
        %1137 = vadd.xlane.f32.xlu0 %v1136
        %v1138 = vpop.xlane.xlu0 %1137
        %v1139 = vrcp.pop %v1138
        %v1140 = vmul.f32 %v1135, %v1139
        %v1141 = vpack.c.bf16 %v1140, %v1140
        %1142 = vrot.lane.b32.xlu0 %v941, 32
        %v1143 = vpop.permute.xlu0 %1142
        %v1145 = vsel %vm712, %v1141, 0
        %v1148 = vsel %vm728, %v1143, 0
        %1150 = vmatpush.bf16.msra.mxu0 0
        %1151 = vmatpush.bf16.msra.mxu0 0
        %1152 = vmatpush.bf16.msra.mxu0 0
        %1153 = vmatpush.bf16.msra.mxu0 0
        %1154 = vmatpush.bf16.msra.mxu0 0
        %1155 = vmatpush.bf16.msra.mxu0 0
        %1156 = vmatpush.bf16.msra.mxu0 0
        %1157 = vmatpush.bf16.msra.mxu0 %v1148
        %1158 = vmatmul.bf16.gmra.mxu0 %v1145
        %v1159 = vpop.f32.mrf.mxu0
        %v1160 = vadd.f32 0.0, %v1159
        %v1161 = vpop.f32.mrf.mxu0
        %1162 = vdwg.mxu0
        %1164 = vrot.lane.b32.xlu0 %v1048, 32
        %v1165 = vpop.permute.xlu0 %1164
        %1168 = vrot.lane.b32.xlu0 %v1104, 64
        %v1169 = vpop.permute.xlu0 %1168
        %1172 = vrot.lane.b32.xlu0 %v1160, 96
        %v1173 = vpop.permute.xlu0 %1172
        %v1175 = vsel %vm692, %v989, %v1165
        %v1176 = vsel %vm935, %v1175, %v1169
        %v1177 = vsel %vm937, %v1176, %v1173
        %v1178 = vpack.c.bf16 %v1177, %v938
        %v1179 = vld [vmem:[%s415] sm:$0xf]
        %v1180 = vld [vmem:[%s415 + $0x4] sm:$0xf]
        %v1181 = vld [vmem:[%s415 + $0x8] sm:$0xf]
        %v1182 = vld [vmem:[%s415 + $0xc] sm:$0xf]
        %v1183 = vld [vmem:[%s415 + $0x10] sm:$0xf]
        %v1184 = vld [vmem:[%s415 + $0x14] sm:$0xf]
        %v1185 = vld [vmem:[%s415 + $0x18] sm:$0xf]
        %v1186 = vld [vmem:[%s415 + $0x1c] sm:$0xf]
        %v1187 = vld [vmem:[%s415 + $0x20] sm:$0xf]
        %v1188 = vld [vmem:[%s415 + $0x24] sm:$0xf]
        %v1189 = vld [vmem:[%s415 + $0x28] sm:$0xf]
        %v1190 = vld [vmem:[%s415 + $0x2c] sm:$0xf]
        %v1191 = vld [vmem:[%s415 + $0x30] sm:$0xf]
        %v1192 = vld [vmem:[%s415 + $0x34] sm:$0xf]
        %v1193 = vld [vmem:[%s415 + $0x38] sm:$0xf]
        %v1194 = vld [vmem:[%s415 + $0x3c] sm:$0xf]
        %v1211 = vunpack.c.l.b16 %v1179
        %v1212 = vunpack.c.l.b16 %v1180
        %v1213 = vunpack.c.l.b16 %v1181
        %v1214 = vunpack.c.l.b16 %v1182
        %v1215 = vunpack.c.l.b16 %v1183
        %v1216 = vunpack.c.l.b16 %v1184
        %v1217 = vunpack.c.l.b16 %v1185
        %v1218 = vunpack.c.l.b16 %v1186
        %v1219 = vunpack.c.l.b16 %v1187
        %v1220 = vunpack.c.l.b16 %v1188
        %v1221 = vunpack.c.l.b16 %v1189
        %v1222 = vunpack.c.l.b16 %v1190
        %v1223 = vunpack.c.l.b16 %v1191
        %v1224 = vunpack.c.l.b16 %v1192
        %v1225 = vunpack.c.l.b16 %v1193
        %v1226 = vunpack.c.l.b16 %v1194
        %v1227 = vpack.c.b16 %v1212, %v1211
        %v1228 = vpack.c.b16 %v1214, %v1213
        %v1229 = vpack.c.b16 %v1216, %v1215
        %v1230 = vpack.c.b16 %v1218, %v1217
        %v1231 = vpack.c.b16 %v1220, %v1219
        %v1232 = vpack.c.b16 %v1222, %v1221
        %v1233 = vpack.c.b16 %v1224, %v1223
        %v1234 = vpack.c.b16 %v1226, %v1225
        %1243 = vmatpush.bf16.msra.mxu0 %v1234
        %1244 = vmatpush.bf16.msra.mxu0 %v1233
        %1245 = vmatpush.bf16.msra.mxu0 %v1232
        %1246 = vmatpush.bf16.msra.mxu0 %v1231
        %1247 = vmatpush.bf16.msra.mxu0 %v1230
        %1248 = vmatpush.bf16.msra.mxu0 %v1229
        %1249 = vmatpush.bf16.msra.mxu0 %v1228
        %1250 = vmatpush.bf16.msra.mxu0 %v1227
        %1251 = vmatmul.bf16.gmra.mxu0 %v1178
        %v1252 = vpop.f32.mrf.mxu0
        %v1253 = vadd.f32 0.0, %v1252
        %v1254 = vpop.f32.mrf.mxu0
        %v1255 = vadd.f32 0.0, %v1254
        %1256 = vdwg.mxu0
        %v1257 = vadd.f32 %v438, %v1253
        %v1258 = vadd.f32 %v439, %v1255
        %v1259 = vld [vmem:[%s418] sm:$0x1]
        %v1260 = vmul.f32 %v1257, %v1257
        %v1261 = vmul.f32 %v1258, %v1258
        %1262 = vadd.xlane.f32.xlu0 %v1260
        %v1263 = vpop.xlane.xlu0 %1262
        %1264 = vadd.xlane.f32.xlu0 %v1261
        %v1265 = vpop.xlane.xlu0 %1264
        %v1266 = vmul.f32 %v1263, %v453
        %v1267 = vmul.f32 %v1265, %v453
        %v1268 = vadd.f32 %v1266, 1e-06
        %v1269 = vadd.f32 %v1267, 1e-06
        %v1270 = vrsqrt.pop %v1268
        %v1271 = vmul.f32 %v1270, %v1268
        %v1272 = vmul.f32 %v1271, %v1270
        %v1273 = vmul.f32 0.5, %v1272
        %v1274 = vsub.f32 1.5, %v1273
        %v1275 = vmul.f32 %v1270, %v1274
        %vm1276 = vweird.f32 %v1268
        %vm1277 = vweird.f32 %v1270
        %vm1278 = vmor %vm1276, %vm1277
        %v1279 = vsel %vm1278, %v1270, %v1275
        %v1280 = vrsqrt.pop %v1269
        %v1281 = vmul.f32 %v1280, %v1269
        %v1282 = vmul.f32 %v1281, %v1280
        %v1283 = vmul.f32 0.5, %v1282
        %v1284 = vsub.f32 1.5, %v1283
        %v1285 = vmul.f32 %v1280, %v1284
        %vm1286 = vweird.f32 %v1269
        %vm1287 = vweird.f32 %v1280
        %vm1288 = vmor %vm1286, %vm1287
        %v1289 = vsel %vm1288, %v1280, %v1285
        %v1290 = vmul.f32 %v1257, %v1279
        %v1291 = vmul.f32 %v1258, %v1289
        %v1293 = vperm.slane %v1259, 0
        %v1295 = vmul.f32 %v1290, %v1293
        %v1296 = vmul.f32 %v1291, %v1293
        %v1297 = vpack.c.bf16 %v1296, %v1295
        %v1298 = vld [vmem:[%s423] sm:$0xff]
        %v1299 = vld [vmem:[%s423 + $0x8] sm:$0xff]
        %v1300 = vld [vmem:[%s423 + $0x10] sm:$0xff]
        %v1301 = vld [vmem:[%s423 + $0x18] sm:$0xff]
        %v1302 = vld [vmem:[%s423 + $0x20] sm:$0xff]
        %v1303 = vld [vmem:[%s423 + $0x28] sm:$0xff]
        %v1304 = vld [vmem:[%s423 + $0x30] sm:$0xff]
        %v1305 = vld [vmem:[%s423 + $0x38] sm:$0xff]
        %v1306 = vld [vmem:[%s423 + $0x40] sm:$0xff]
        %v1307 = vld [vmem:[%s423 + $0x48] sm:$0xff]
        %v1308 = vld [vmem:[%s423 + $0x50] sm:$0xff]
        %v1309 = vld [vmem:[%s423 + $0x58] sm:$0xff]
        %v1310 = vld [vmem:[%s423 + $0x60] sm:$0xff]
        %v1311 = vld [vmem:[%s423 + $0x68] sm:$0xff]
        %v1312 = vld [vmem:[%s423 + $0x70] sm:$0xff]
        %v1313 = vld [vmem:[%s423 + $0x78] sm:$0xff]
        %v1314 = vld [vmem:[%s423 + $0x80] sm:$0xff]
        %v1315 = vld [vmem:[%s423 + $0x88] sm:$0xff]
        %v1316 = vld [vmem:[%s423 + $0x90] sm:$0xff]
        %v1317 = vld [vmem:[%s423 + $0x98] sm:$0xff]
        %v1318 = vld [vmem:[%s423 + $0xa0] sm:$0xff]
        %v1319 = vld [vmem:[%s423 + $0xa8] sm:$0xff]
        %v1320 = vld [vmem:[%s423 + $0xb0] sm:$0xff]
        %v1321 = vld [vmem:[%s423 + $0xb8] sm:$0xff]
        %v1322 = vld [vmem:[%s423 + $0xc0] sm:$0xff]
        %v1323 = vld [vmem:[%s423 + $0xc8] sm:$0xff]
        %v1324 = vld [vmem:[%s423 + $0xd0] sm:$0xff]
        %v1325 = vld [vmem:[%s423 + $0xd8] sm:$0xff]
        %v1326 = vld [vmem:[%s423 + $0xe0] sm:$0xff]
        %v1327 = vld [vmem:[%s423 + $0xe8] sm:$0xff]
        %v1328 = vld [vmem:[%s423 + $0xf0] sm:$0xff]
        %v1329 = vld [vmem:[%s423 + $0xf8] sm:$0xff]
        %v1362 = vunpack.c.l.b16 %v1298
        %v1363 = vunpack.c.h.b16 %v1298
        %v1364 = vunpack.c.l.b16 %v1299
        %v1365 = vunpack.c.h.b16 %v1299
        %v1366 = vunpack.c.l.b16 %v1300
        %v1367 = vunpack.c.h.b16 %v1300
        %v1368 = vunpack.c.l.b16 %v1301
        %v1369 = vunpack.c.h.b16 %v1301
        %v1370 = vunpack.c.l.b16 %v1302
        %v1371 = vunpack.c.h.b16 %v1302
        %v1372 = vunpack.c.l.b16 %v1303
        %v1373 = vunpack.c.h.b16 %v1303
        %v1374 = vunpack.c.l.b16 %v1304
        %v1375 = vunpack.c.h.b16 %v1304
        %v1376 = vunpack.c.l.b16 %v1305
        %v1377 = vunpack.c.h.b16 %v1305
        %v1378 = vunpack.c.l.b16 %v1306
        %v1379 = vunpack.c.h.b16 %v1306
        %v1380 = vunpack.c.l.b16 %v1307
        %v1381 = vunpack.c.h.b16 %v1307
        %v1382 = vunpack.c.l.b16 %v1308
        %v1383 = vunpack.c.h.b16 %v1308
        %v1384 = vunpack.c.l.b16 %v1309
        %v1385 = vunpack.c.h.b16 %v1309
        %v1386 = vunpack.c.l.b16 %v1310
        %v1387 = vunpack.c.h.b16 %v1310
        %v1388 = vunpack.c.l.b16 %v1311
        %v1389 = vunpack.c.h.b16 %v1311
        %v1390 = vunpack.c.l.b16 %v1312
        %v1391 = vunpack.c.h.b16 %v1312
        %v1392 = vunpack.c.l.b16 %v1313
        %v1393 = vunpack.c.h.b16 %v1313
        %v1394 = vunpack.c.l.b16 %v1314
        %v1395 = vunpack.c.h.b16 %v1314
        %v1396 = vunpack.c.l.b16 %v1315
        %v1397 = vunpack.c.h.b16 %v1315
        %v1398 = vunpack.c.l.b16 %v1316
        %v1399 = vunpack.c.h.b16 %v1316
        %v1400 = vunpack.c.l.b16 %v1317
        %v1401 = vunpack.c.h.b16 %v1317
        %v1402 = vunpack.c.l.b16 %v1318
        %v1403 = vunpack.c.h.b16 %v1318
        %v1404 = vunpack.c.l.b16 %v1319
        %v1405 = vunpack.c.h.b16 %v1319
        %v1406 = vunpack.c.l.b16 %v1320
        %v1407 = vunpack.c.h.b16 %v1320
        %v1408 = vunpack.c.l.b16 %v1321
        %v1409 = vunpack.c.h.b16 %v1321
        %v1410 = vunpack.c.l.b16 %v1322
        %v1411 = vunpack.c.h.b16 %v1322
        %v1412 = vunpack.c.l.b16 %v1323
        %v1413 = vunpack.c.h.b16 %v1323
        %v1414 = vunpack.c.l.b16 %v1324
        %v1415 = vunpack.c.h.b16 %v1324
        %v1416 = vunpack.c.l.b16 %v1325
        %v1417 = vunpack.c.h.b16 %v1325
        %v1418 = vunpack.c.l.b16 %v1326
        %v1419 = vunpack.c.h.b16 %v1326
        %v1420 = vunpack.c.l.b16 %v1327
        %v1421 = vunpack.c.h.b16 %v1327
        %v1422 = vunpack.c.l.b16 %v1328
        %v1423 = vunpack.c.h.b16 %v1328
        %v1424 = vunpack.c.l.b16 %v1329
        %v1425 = vunpack.c.h.b16 %v1329
        %v1426 = vpack.c.b16 %v1366, %v1362
        %v1427 = vpack.c.b16 %v1367, %v1363
        %v1428 = vpack.c.b16 %v1368, %v1364
        %v1429 = vpack.c.b16 %v1369, %v1365
        %v1430 = vpack.c.b16 %v1374, %v1370
        %v1431 = vpack.c.b16 %v1375, %v1371
        %v1432 = vpack.c.b16 %v1376, %v1372
        %v1433 = vpack.c.b16 %v1377, %v1373
        %v1434 = vpack.c.b16 %v1382, %v1378
        %v1435 = vpack.c.b16 %v1383, %v1379
        %v1436 = vpack.c.b16 %v1384, %v1380
        %v1437 = vpack.c.b16 %v1385, %v1381
        %v1438 = vpack.c.b16 %v1390, %v1386
        %v1439 = vpack.c.b16 %v1391, %v1387
        %v1440 = vpack.c.b16 %v1392, %v1388
        %v1441 = vpack.c.b16 %v1393, %v1389
        %v1442 = vpack.c.b16 %v1398, %v1394
        %v1443 = vpack.c.b16 %v1399, %v1395
        %v1444 = vpack.c.b16 %v1400, %v1396
        %v1445 = vpack.c.b16 %v1401, %v1397
        %v1446 = vpack.c.b16 %v1406, %v1402
        %v1447 = vpack.c.b16 %v1407, %v1403
        %v1448 = vpack.c.b16 %v1408, %v1404
        %v1449 = vpack.c.b16 %v1409, %v1405
        %v1450 = vpack.c.b16 %v1414, %v1410
        %v1451 = vpack.c.b16 %v1415, %v1411
        %v1452 = vpack.c.b16 %v1416, %v1412
        %v1453 = vpack.c.b16 %v1417, %v1413
        %v1454 = vpack.c.b16 %v1422, %v1418
        %v1455 = vpack.c.b16 %v1423, %v1419
        %v1456 = vpack.c.b16 %v1424, %v1420
        %v1457 = vpack.c.b16 %v1425, %v1421
        %1490 = vmatpush.bf16.msra.mxu0 %v1454
        %1491 = vmatpush.bf16.msra.mxu0 %v1450
        %1492 = vmatpush.bf16.msra.mxu0 %v1446
        %1493 = vmatpush.bf16.msra.mxu0 %v1442
        %1494 = vmatpush.bf16.msra.mxu0 %v1438
        %1495 = vmatpush.bf16.msra.mxu0 %v1434
        %1496 = vmatpush.bf16.msra.mxu0 %v1430
        %1497 = vmatpush.bf16.msra.mxu0 %v1426
        %1498 = vmatmul.bf16.gmra.mxu0 %v1297
        %v1499 = vpop.f32.mrf.mxu0
        %v1500 = vadd.f32 0.0, %v1499
        %v1501 = vpop.f32.mrf.mxu0
        %v1502 = vadd.f32 0.0, %v1501
        %1503 = vdwg.mxu0
        %1504 = vmatpush.bf16.msra.mxu0 %v1455
        %1505 = vmatpush.bf16.msra.mxu0 %v1451
        %1506 = vmatpush.bf16.msra.mxu0 %v1447
        %1507 = vmatpush.bf16.msra.mxu0 %v1443
        %1508 = vmatpush.bf16.msra.mxu0 %v1439
        %1509 = vmatpush.bf16.msra.mxu0 %v1435
        %1510 = vmatpush.bf16.msra.mxu0 %v1431
        %1511 = vmatpush.bf16.msra.mxu0 %v1427
        %1512 = vmatmul.bf16.gmra.mxu0 %v1297
        %v1513 = vpop.f32.mrf.mxu0
        %v1514 = vadd.f32 0.0, %v1513
        %v1515 = vpop.f32.mrf.mxu0
        %v1516 = vadd.f32 0.0, %v1515
        %1517 = vdwg.mxu0
        %1518 = vmatpush.bf16.msra.mxu0 %v1456
        %1519 = vmatpush.bf16.msra.mxu0 %v1452
        %1520 = vmatpush.bf16.msra.mxu0 %v1448
        %1521 = vmatpush.bf16.msra.mxu0 %v1444
        %1522 = vmatpush.bf16.msra.mxu0 %v1440
        %1523 = vmatpush.bf16.msra.mxu0 %v1436
        %1524 = vmatpush.bf16.msra.mxu0 %v1432
        %1525 = vmatpush.bf16.msra.mxu0 %v1428
        %1526 = vmatmul.bf16.gmra.mxu0 %v1297
        %v1527 = vpop.f32.mrf.mxu0
        %v1528 = vadd.f32 0.0, %v1527
        %v1529 = vpop.f32.mrf.mxu0
        %v1530 = vadd.f32 0.0, %v1529
        %1531 = vdwg.mxu0
        %1532 = vmatpush.bf16.msra.mxu0 %v1457
        %1533 = vmatpush.bf16.msra.mxu0 %v1453
        %1534 = vmatpush.bf16.msra.mxu0 %v1449
        %1535 = vmatpush.bf16.msra.mxu0 %v1445
        %1536 = vmatpush.bf16.msra.mxu0 %v1441
        %1537 = vmatpush.bf16.msra.mxu0 %v1437
        %1538 = vmatpush.bf16.msra.mxu0 %v1433
        %1539 = vmatpush.bf16.msra.mxu0 %v1429
        %1540 = vmatmul.bf16.gmra.mxu0 %v1297
        %v1541 = vpop.f32.mrf.mxu0
        %v1542 = vadd.f32 0.0, %v1541
        %v1543 = vpop.f32.mrf.mxu0
        %v1544 = vadd.f32 0.0, %v1543
        %1545 = vdwg.mxu0
        %v1546 = vmul.f32 %v1500, 0.5
        %v1547 = vmul.f32 %v1514, 0.5
        %v1548 = vmul.f32 %v1502, 0.5
        %v1549 = vmul.f32 %v1516, 0.5
        %v1550 = vmul.f32 %v1500, 0.044715
        %v1551 = vmul.f32 %v1514, 0.044715
        %v1552 = vmul.f32 %v1502, 0.044715
        %v1553 = vmul.f32 %v1516, 0.044715
        %v1554 = vmul.f32 %v1550, %v1500
        %v1555 = vmul.f32 %v1551, %v1514
        %v1556 = vmul.f32 %v1552, %v1502
        %v1557 = vmul.f32 %v1553, %v1516
        %v1558 = vmul.f32 %v1554, %v1500
        %v1559 = vmul.f32 %v1555, %v1514
        %v1560 = vmul.f32 %v1556, %v1502
        %v1561 = vmul.f32 %v1557, %v1516
        %v1562 = vadd.f32 %v1500, %v1558
        %v1563 = vadd.f32 %v1514, %v1559
        %v1564 = vadd.f32 %v1502, %v1560
        %v1565 = vadd.f32 %v1516, %v1561
        %v1566 = vmul.f32 %v1562, 0.7978846
        %v1567 = vmul.f32 %v1563, 0.7978846
        %v1568 = vmul.f32 %v1564, 0.7978846
        %v1569 = vmul.f32 %v1565, 0.7978846
        %v1570 = vtanh.pop %v1566
        %v1571 = vtanh.pop %v1567
        %v1572 = vtanh.pop %v1568
        %v1573 = vtanh.pop %v1569
        %v1574 = vadd.f32 %v1570, 1.0
        %v1575 = vadd.f32 %v1571, 1.0
        %v1576 = vadd.f32 %v1572, 1.0
        %v1577 = vadd.f32 %v1573, 1.0
        %v1578 = vmul.f32 %v1546, %v1574
        %v1579 = vmul.f32 %v1547, %v1575
        %v1580 = vmul.f32 %v1548, %v1576
        %v1581 = vmul.f32 %v1549, %v1577
        %v1582 = vmul.f32 %v1578, %v1528
        %v1583 = vmul.f32 %v1579, %v1542
        %v1584 = vmul.f32 %v1580, %v1530
        %v1585 = vmul.f32 %v1581, %v1544
        %v1586 = vpack.c.bf16 %v1584, %v1582
        %v1587 = vpack.c.bf16 %v1585, %v1583
        %v1588 = vld [vmem:[%s428] sm:$0xf]
        %v1589 = vld [vmem:[%s428 + $0x4] sm:$0xf]
        %v1590 = vld [vmem:[%s428 + $0x8] sm:$0xf]
        %v1591 = vld [vmem:[%s428 + $0xc] sm:$0xf]
        %v1592 = vld [vmem:[%s428 + $0x10] sm:$0xf]
        %v1593 = vld [vmem:[%s428 + $0x14] sm:$0xf]
        %v1594 = vld [vmem:[%s428 + $0x18] sm:$0xf]
        %v1595 = vld [vmem:[%s428 + $0x1c] sm:$0xf]
        %v1596 = vld [vmem:[%s428 + $0x20] sm:$0xf]
        %v1597 = vld [vmem:[%s428 + $0x24] sm:$0xf]
        %v1598 = vld [vmem:[%s428 + $0x28] sm:$0xf]
        %v1599 = vld [vmem:[%s428 + $0x2c] sm:$0xf]
        %v1600 = vld [vmem:[%s428 + $0x30] sm:$0xf]
        %v1601 = vld [vmem:[%s428 + $0x34] sm:$0xf]
        %v1602 = vld [vmem:[%s428 + $0x38] sm:$0xf]
        %v1603 = vld [vmem:[%s428 + $0x3c] sm:$0xf]
        %v1604 = vld [vmem:[%s428 + $0x40] sm:$0xf]
        %v1605 = vld [vmem:[%s428 + $0x44] sm:$0xf]
        %v1606 = vld [vmem:[%s428 + $0x48] sm:$0xf]
        %v1607 = vld [vmem:[%s428 + $0x4c] sm:$0xf]
        %v1608 = vld [vmem:[%s428 + $0x50] sm:$0xf]
        %v1609 = vld [vmem:[%s428 + $0x54] sm:$0xf]
        %v1610 = vld [vmem:[%s428 + $0x58] sm:$0xf]
        %v1611 = vld [vmem:[%s428 + $0x5c] sm:$0xf]
        %v1612 = vld [vmem:[%s428 + $0x60] sm:$0xf]
        %v1613 = vld [vmem:[%s428 + $0x64] sm:$0xf]
        %v1614 = vld [vmem:[%s428 + $0x68] sm:$0xf]
        %v1615 = vld [vmem:[%s428 + $0x6c] sm:$0xf]
        %v1616 = vld [vmem:[%s428 + $0x70] sm:$0xf]
        %v1617 = vld [vmem:[%s428 + $0x74] sm:$0xf]
        %v1618 = vld [vmem:[%s428 + $0x78] sm:$0xf]
        %v1619 = vld [vmem:[%s428 + $0x7c] sm:$0xf]
        %v1652 = vunpack.c.l.b16 %v1588
        %v1653 = vunpack.c.l.b16 %v1589
        %v1654 = vunpack.c.l.b16 %v1590
        %v1655 = vunpack.c.l.b16 %v1591
        %v1656 = vunpack.c.l.b16 %v1592
        %v1657 = vunpack.c.l.b16 %v1593
        %v1658 = vunpack.c.l.b16 %v1594
        %v1659 = vunpack.c.l.b16 %v1595
        %v1660 = vunpack.c.l.b16 %v1596
        %v1661 = vunpack.c.l.b16 %v1597
        %v1662 = vunpack.c.l.b16 %v1598
        %v1663 = vunpack.c.l.b16 %v1599
        %v1664 = vunpack.c.l.b16 %v1600
        %v1665 = vunpack.c.l.b16 %v1601
        %v1666 = vunpack.c.l.b16 %v1602
        %v1667 = vunpack.c.l.b16 %v1603
        %v1668 = vunpack.c.l.b16 %v1604
        %v1669 = vunpack.c.l.b16 %v1605
        %v1670 = vunpack.c.l.b16 %v1606
        %v1671 = vunpack.c.l.b16 %v1607
        %v1672 = vunpack.c.l.b16 %v1608
        %v1673 = vunpack.c.l.b16 %v1609
        %v1674 = vunpack.c.l.b16 %v1610
        %v1675 = vunpack.c.l.b16 %v1611
        %v1676 = vunpack.c.l.b16 %v1612
        %v1677 = vunpack.c.l.b16 %v1613
        %v1678 = vunpack.c.l.b16 %v1614
        %v1679 = vunpack.c.l.b16 %v1615
        %v1680 = vunpack.c.l.b16 %v1616
        %v1681 = vunpack.c.l.b16 %v1617
        %v1682 = vunpack.c.l.b16 %v1618
        %v1683 = vunpack.c.l.b16 %v1619
        %v1684 = vpack.c.b16 %v1653, %v1652
        %v1685 = vpack.c.b16 %v1655, %v1654
        %v1686 = vpack.c.b16 %v1657, %v1656
        %v1687 = vpack.c.b16 %v1659, %v1658
        %v1688 = vpack.c.b16 %v1661, %v1660
        %v1689 = vpack.c.b16 %v1663, %v1662
        %v1690 = vpack.c.b16 %v1665, %v1664
        %v1691 = vpack.c.b16 %v1667, %v1666
        %v1692 = vpack.c.b16 %v1669, %v1668
        %v1693 = vpack.c.b16 %v1671, %v1670
        %v1694 = vpack.c.b16 %v1673, %v1672
        %v1695 = vpack.c.b16 %v1675, %v1674
        %v1696 = vpack.c.b16 %v1677, %v1676
        %v1697 = vpack.c.b16 %v1679, %v1678
        %v1698 = vpack.c.b16 %v1681, %v1680
        %v1699 = vpack.c.b16 %v1683, %v1682
        %1716 = vmatpush.bf16.msra.mxu0 %v1691
        %1717 = vmatpush.bf16.msra.mxu0 %v1690
        %1718 = vmatpush.bf16.msra.mxu0 %v1689
        %1719 = vmatpush.bf16.msra.mxu0 %v1688
        %1720 = vmatpush.bf16.msra.mxu0 %v1687
        %1721 = vmatpush.bf16.msra.mxu0 %v1686
        %1722 = vmatpush.bf16.msra.mxu0 %v1685
        %1723 = vmatpush.bf16.msra.mxu0 %v1684
        %1724 = vmatmul.bf16.gmra.mxu0 %v1586
        %v1725 = vpop.f32.mrf.mxu0
        %v1726 = vadd.f32 0.0, %v1725
        %v1727 = vpop.f32.mrf.mxu0
        %v1728 = vadd.f32 0.0, %v1727
        %1729 = vdwg.mxu0
        %1730 = vmatpush.bf16.msra.mxu0 %v1699
        %1731 = vmatpush.bf16.msra.mxu0 %v1698
        %1732 = vmatpush.bf16.msra.mxu0 %v1697
        %1733 = vmatpush.bf16.msra.mxu0 %v1696
        %1734 = vmatpush.bf16.msra.mxu0 %v1695
        %1735 = vmatpush.bf16.msra.mxu0 %v1694
        %1736 = vmatpush.bf16.msra.mxu0 %v1693
        %1737 = vmatpush.bf16.msra.mxu0 %v1692
        %1738 = vmatmul.bf16.gmra.mxu0 %v1587
        %v1739 = vpop.f32.mrf.mxu0
        %v1740 = vadd.f32 %v1726, %v1739
        %v1741 = vpop.f32.mrf.mxu0
        %v1742 = vadd.f32 %v1728, %v1741
        %1743 = vdwg.mxu0
        %v1744 = vadd.f32 %v1257, %v1740
        %v1745 = vadd.f32 %v1258, %v1742
        %1746 = vst [vmem:[#allocation2] sm:$0xff] %v1744
        %1747 = vst [vmem:[#allocation2 + $0x8] sm:$0xff] %v1745
        %p1748 = scmp.eq.s32.totalorder %s24, 1
        // Predicated region
        $region65: #{t5_encoder_forward.1} parent=55 // pred_check
          %p1749 = pneg %p1748
        $region66: #{t5_encoder_forward.1} parent=55 // pred_check_branch
          %1751 = sbr.rel (%p1749) target = $region68
        $region67: #{t5_encoder_forward.1} parent=55 // pred_region
          %v1752 = vld [vmem:[%s8] sm:$0x1]
          %v1753 = vmul.f32 %v1744, %v1744
          %v1754 = vmul.f32 %v1745, %v1745
          %1755 = vadd.xlane.f32.xlu0 %v1753
          %v1756 = vpop.xlane.xlu0 %1755
          %1757 = vadd.xlane.f32.xlu0 %v1754
          %v1758 = vpop.xlane.xlu0 %1757
          %v1759 = vmul.f32 %v1756, %v453
          %v1760 = vmul.f32 %v1758, %v453
          %v1761 = vadd.f32 %v1759, 1e-06
          %v1762 = vadd.f32 %v1760, 1e-06
          %v1763 = vrsqrt.pop %v1761
          %v1764 = vmul.f32 %v1763, %v1761
          %v1765 = vmul.f32 %v1764, %v1763
          %v1766 = vmul.f32 0.5, %v1765
          %v1767 = vsub.f32 1.5, %v1766
          %v1768 = vmul.f32 %v1763, %v1767
          %vm1769 = vweird.f32 %v1761
          %vm1770 = vweird.f32 %v1763
          %vm1771 = vmor %vm1769, %vm1770
          %v1772 = vsel %vm1771, %v1763, %v1768
          %v1773 = vrsqrt.pop %v1762
          %v1774 = vmul.f32 %v1773, %v1762
          %v1775 = vmul.f32 %v1774, %v1773
          %v1776 = vmul.f32 0.5, %v1775
          %v1777 = vsub.f32 1.5, %v1776
          %v1778 = vmul.f32 %v1773, %v1777
          %vm1779 = vweird.f32 %v1762
          %vm1780 = vweird.f32 %v1773
          %vm1781 = vmor %vm1779, %vm1780
          %v1782 = vsel %vm1781, %v1773, %v1778
          %v1783 = vmul.f32 %v1744, %v1772
          %v1784 = vmul.f32 %v1745, %v1782
          %v1786 = vperm.slane %v1752, 0
          %v1788 = vmul.f32 %v1783, %v1786
          %v1789 = vmul.f32 %v1784, %v1786
          %1790 = vst [vmem:[#allocation6] sm:$0xff] %v1788
          %1791 = vst [vmem:[#allocation6 + $0x8] sm:$0xff] %v1789
        $region68: #{t5_encoder_forward.1} parent=55 // pred_fallthru
          _
        // Predicated region
        $region69: #{t5_encoder_forward.1} parent=55 // pred_check
          %p1792 = pneg %p256
        $region70: #{t5_encoder_forward.1} parent=55 // pred_check_branch
          %1794 = sbr.rel (%p1792) target = $region72
        $region71: #{t5_encoder_forward.1} parent=55 // pred_region
          %1796 = vsyncadd [#allocation5], 0
          %s1797 = sshll.u32 [#allocation6], 4
          %s1798 = int_to_ptr.vmem [resolvable:$true] %s1797
          %s1799 = sshll.u32 %s9, 4
          %s1800 = int_to_ptr.hbm [resolvable:$true] %s1799
          %1805 = dma.vmem_to_hbm [thread:$0]  %s1798, 256, %s1800, [#allocation5], 128, 128, 8
        $region72: #{t5_encoder_forward.1} parent=55 // pred_fallthru
          _
        // Predicated region
        $region73: #{t5_encoder_forward.1} parent=55 // pred_check
          %p1806 = pneg %p256
        $region74: #{t5_encoder_forward.1} parent=55 // pred_check_branch
          %1808 = sbr.rel (%p1806) target = $region76
        $region75: #{t5_encoder_forward.1} parent=55 // pred_region
          %1810 = dma.done [#allocation5], 256
        $region76: #{t5_encoder_forward.1} parent=55 // pred_fallthru
          _
      $region56: #{t5_encoder_forward.1} parent=5 // pred_fallthru
        _
      %p1811 = scmp.le.s32.totalorder 2, %s19
      // Predicated region
      $region77: #{t5_encoder_forward.1} parent=5 // pred_check
        %p1812 = pneg %p1811
      $region78: #{t5_encoder_forward.1} parent=5 // pred_check_branch
        %1814 = sbr.rel (%p1812) target = $region80
      $region79: #{t5_encoder_forward.1} parent=5 // pred_region
        %s1815 = ssub.s32 %s19, 2
      $region80: #{t5_encoder_forward.1} parent=5 // pred_fallthru
        _
    $region6: #{t5_encoder_forward.1} parent=1 // loop_footer
      %s23 = sadd.s32 1, %s19
    $region7: #{t5_encoder_forward.1} parent=1 // loop_footer_branch
      %18 = sbr.rel target = $region3
    $region8: #{t5_encoder_forward.1} parent=1 // loop_exit
      _
    %1816 = vsyncpa [#allocation4], 1
    %s1817 = scalar_lea.sflag [#allocation4], 1
    %1818 = vsyncpa %s1817, 1
    %1819 = vsyncpa [#allocation5], 1
    %s1820 = scalar_lea.sflag [#allocation5], 1
    %1821 = vsyncpa %s1820, 1

</llo_original>
